<compile_context>
chip_gen: v6e
topology: v6e:2x2x1
jax: 0.10.0
libtpu: 0.0.40
codegen_flags: <defaults>
</compile_context>

<pallas_src>
import math

import jax
import jax.numpy as jnp
from jax import lax
from jax.experimental import pallas as pl
from jax.experimental.pallas import tpu as pltpu


# -----------------------------------------------------------------------------
# Fused ConvBlock kernel (one grid step == one batch element, all layers fused)
# -----------------------------------------------------------------------------
def _make_conv_block_kernel(num_layers, e_pad, compute_dtype):
    def kernel(nb_ref, x_ref, *rest):
        w_refs = rest[:num_layers]            # each (C_out, 5*C_in_l) compute_dtype
        b_ref = rest[num_layers]              # (C_out, num_layers) f32
        o_ref = rest[num_layers + 1]          # (C_out, E) f32

        E = e_pad
        nb = nb_ref[...]                      # (4, E) int32, -1 = boundary pad

        # One-hot gather matrices built directly in compute_dtype (bf16); the
        # iota is inlined per compare so no int32 (E,E) temp stays resident.
        # Index -1 never matches -> selects MeshCNN's zero-pad column.
        def onehot(row):
            return (nb[row:row + 1, :] ==
                    lax.broadcasted_iota(jnp.int32, (E, E), 0)).astype(compute_dtype)

        e1 = onehot(0)
        e3 = onehot(2)
        a13 = e1 + e3                         # gathers n1 + n3   ({0,1,2}: exact in bf16)
        d13 = e1 - e3                         # gathers n1 - n3   ({-1,0,1}: exact)
        e2 = onehot(1)
        e4 = onehot(3)
        a24 = e2 + e4
        d24 = e2 - e4
        # Single (E, 4E) gather RHS: one MXU matmul per layer instead of four.
        gmat = jnp.concatenate([a13, a24, d13, d24], axis=1)

        x = x_ref[...]                        # (C_in, E) f32, stays in VMEM across layers
        for l in range(num_layers):
            xc = x.astype(compute_dtype)
            # One fused gather matmul, f32 accumulation, single bf16 recast.
            gc = jnp.dot(xc, gmat, preferred_element_type=jnp.float32
                         ).astype(compute_dtype)                # (C, 4E)
            # Lane-aligned slices (offsets are multiples of E_pad -> free).
            feat = jnp.concatenate(
                [xc,
                 gc[:, 0 * E:1 * E],                            # n1 + n3
                 gc[:, 1 * E:2 * E],                            # n2 + n4
                 jnp.abs(gc[:, 2 * E:3 * E]),                   # |n1 - n3|
                 jnp.abs(gc[:, 3 * E:4 * E])],                  # |n2 - n4|
                axis=0)                                         # (5*C, E)
            # One fused Conv2d(1,5) matmul: (C_out, 5*C) x (5*C, E), f32 acc.
            y = jnp.dot(w_refs[l][...], feat, preferred_element_type=jnp.float32)
            y = y + b_ref[:, l:l + 1]                           # packed bias, f32
            x = y                                               # never hits HBM
        o_ref[...] = x

    return kernel


# -----------------------------------------------------------------------------
# Per-generation VMEM budgeting
# -----------------------------------------------------------------------------
def _pick_vmem_limit(need_bytes):
    kind = ""
    try:
        kind = jax.devices()[0].device_kind.lower()
    except Exception:
        pass
    # v7x has 64 MiB physical VMEM per TensorCore; v5e/v6e have 128 MiB.
    physical = 64 * 1024 * 1024 if "v7" in kind else 128 * 1024 * 1024
    headroom = 16 * 1024 * 1024
    return int(min(max(need_bytes, 32 * 1024 * 1024), physical - headroom))


# -----------------------------------------------------------------------------
# ConvBlock forward wrapper
# -----------------------------------------------------------------------------
def conv_block_forward(x, gemm_edges, weights, biases, *, compute_dtype=jnp.bfloat16):
    """ConvBlock.forward.

    x          : (B, C_in, E) f32 edge features (PyTorch input squeezed of its
                 trailing singleton spatial dim).
    gemm_edges : (B, E, 4) int32 GeMM neighbor edge indices, -1 = boundary pad.
    weights    : list of k Conv2d weights, weights[l] has shape (C_out, C_in_l, 1, 5).
    biases     : list of k biases, each (C_out,).
    returns    : (B, C_out, E) f32.
    """
    B, C_in, E = x.shape
    num_layers = len(weights)
    C_out = weights[0].shape[0]

    # Pad the edge axis to a lane-dense multiple of 128 (unmasked vector stores).
    E_pad = max(128, ((E + 127) // 128) * 128)
    if E_pad != E:
        x = jnp.pad(x, ((0, 0), (0, 0), (0, E_pad - E)))
        gemm_edges = jnp.pad(gemm_edges, ((0, 0), (0, E_pad - E), (0, 0)),
                             constant_values=-1)

    nb_t = jnp.transpose(gemm_edges.astype(jnp.int32), (0, 2, 1))   # (B, 4, E_pad)
    x = x.astype(jnp.float32)

    # Conv2d weight (C_out, C_in, 1, 5) -> single contiguous fused layout
    # (C_out, 5*C_in) with column block t holding tap t's (C_out, C_in) slab,
    # matching the kernel's [x; g1; g2; |g3|; |g4|] feature stacking.
    w_fused = [
        jnp.transpose(W[:, :, 0, :], (0, 2, 1)).reshape(W.shape[0], 5 * W.shape[1]
                                                        ).astype(compute_dtype)
        for W in weights
    ]
    b_pack = jnp.stack([b.astype(jnp.float32) for b in biases], axis=1)  # (C_out, k)

    in_specs = [
        pl.BlockSpec((None, 4, E_pad), lambda i: (i, 0, 0)),
        pl.BlockSpec((None, C_in, E_pad), lambda i: (i, 0, 0)),
    ]
    for wf in w_fused:
        in_specs.append(pl.BlockSpec(wf.shape, lambda i: (0, 0)))
    in_specs.append(pl.BlockSpec(b_pack.shape, lambda i: (0, 0)))

    # Cost estimate (per-layer: one (C,E)x(E,4E) gather dot + one (C_out,5C)x(5C,E) conv dot).
    flops = 0
    c = C_in
    for _ in range(num_layers):
        flops += 2 * c * E_pad * 4 * E_pad
        flops += 2 * C_out * 5 * c * E_pad
        c = C_out
    flops *= B
    bytes_accessed = int(nb_t.size * 4 + x.size * 4
                         + sum(w.size * 2 for w in w_fused)
                         + b_pack.size * 4 + B * C_out * E_pad * 4)
    cost = pl.CostEstimate(flops=flops, transcendentals=0,
                           bytes_accessed=bytes_accessed)

    # VMEM need estimate (per grid step): fused one-hot RHS (E,4E) bf16, the
    # pairwise eq temps, gather result slab, feature slab, weights, double-
    # buffered I/O blocks.
    max_c = max(C_in, C_out)
    need = (8 * E_pad * E_pad                       # gmat bf16
            + 4 * E_pad * E_pad                     # eq/one-hot temps bf16
            + 4 * max_c * 4 * E_pad                 # (C, 4E) f32 gather result
            + 2 * 5 * max_c * E_pad                 # feature slab bf16
            + sum(w.size * 2 for w in w_fused)
            + 2 * (4 * E_pad * 4 + C_in * E_pad * 4 + C_out * E_pad * 4))
    vmem_limit = _pick_vmem_limit(need)

    out = pl.pallas_call(
        _make_conv_block_kernel(num_layers, E_pad, compute_dtype),
        out_shape=jax.ShapeDtypeStruct((B, C_out, E_pad), jnp.float32),
        grid=(B,),
        in_specs=in_specs,
        out_specs=pl.BlockSpec((None, C_out, E_pad), lambda i: (i, 0, 0)),
        compiler_params=pltpu.CompilerParams(
            dimension_semantics=("parallel",),        # shards batch over 2 TCs on v7x
            vmem_limit_bytes=vmem_limit,
        ),
        cost_estimate=cost,
    )(nb_t, x, *w_fused, b_pack)

    return out[:, :, :E]


# -----------------------------------------------------------------------------
# Pure-JAX reference (mirrors MeshCNN create_GeMM + Conv2d(1,5))
# -----------------------------------------------------------------------------
def conv_block_reference(x, gemm_edges, weights, biases):
    for W, b in zip(weights, biases):
        xp = jnp.pad(x, ((0, 0), (0, 0), (1, 0)))          # zero-pad column (index 0)
        idx = gemm_edges + 1                               # -1 -> 0 (zero pad)
        n = jax.vmap(lambda xb, ib: xb[:, ib])(xp, idx)    # (B, C, E, 4)
        n1, n2, n3, n4 = n[..., 0], n[..., 1], n[..., 2], n[..., 3]
        f = jnp.stack([x, n1 + n3, n2 + n4,
                       jnp.abs(n1 - n3), jnp.abs(n2 - n4)], axis=-1)   # (B, C, E, 5)
        x = jnp.einsum('ocj,bcej->boe', W[:, :, 0, :], f) + b[None, :, None]
    return x


# -----------------------------------------------------------------------------
# Deterministic parameter init (xavier-normal, like reset_params / weight_init)
# -----------------------------------------------------------------------------
def init_conv_block_params(key, in_feat, out_feat, k):
    weights, biases = [], []
    c_in = in_feat
    for _ in range(k):
        key, kw, kb = jax.random.split(key, 3)
        fan_in, fan_out = c_in * 5, out_feat * 5
        std = math.sqrt(2.0 / (fan_in + fan_out))
        weights.append(std * jax.random.normal(kw, (out_feat, c_in, 1, 5), dtype=jnp.float32))
        biases.append(0.1 * jax.random.normal(kb, (out_feat,), dtype=jnp.float32))
        c_in = out_feat
    return weights, biases


# -----------------------------------------------------------------------------
if __name__ == "__main__":
    key = jax.random.PRNGKey(0)

    B = 2           # batch of meshes
    C_in = 5        # MeshCNN's 5 input edge features
    C_out = 16
    E = 200         # edges (padded to 256 inside the wrapper)
    k = 2           # ConvBlock(in_feat, out_feat, k=2): two chained MeshConvs

    k_x, k_nb, k_p = jax.random.split(key, 3)
    x = jax.random.normal(k_x, (B, C_in, E), dtype=jnp.float32)
    # GeMM neighborhoods; -1 marks a boundary edge (MeshCNN pad convention).
    gemm_edges = jax.random.randint(k_nb, (B, E, 4), -1, E).astype(jnp.int32)
    weights, biases = init_conv_block_params(k_p, C_in, C_out, k)

    out = conv_block_forward(x, gemm_edges, weights, biases)
    out = jax.block_until_ready(out)
    assert out.shape == (B, C_out, E)

    # Correctness check against the pure-JAX reference (bf16 matmul tolerance).
    ref = jax.block_until_ready(conv_block_reference(x, gemm_edges, weights, biases))
    err = float(jnp.max(jnp.abs(out - ref)))
    scale = float(jnp.max(jnp.abs(ref))) + 1e-6
    assert err <= 5e-2 * scale + 1e-3, f"mismatch: max_err={err}, scale={scale}"

    print("KERNEL_OK")
</pallas_src>

<mosaic_0001>
module attributes {stable_mosaic.version = 11 : i64} {
  func.func @kernel(%arg0: i32, %arg1: memref<1x4x256xi32, #tpu.memory_space<vmem>>, %arg2: memref<1x5x256xf32, #tpu.memory_space<vmem>>, %arg3: memref<16x25xbf16, #tpu.memory_space<vmem>>, %arg4: memref<16x80xbf16, #tpu.memory_space<vmem>>, %arg5: memref<16x2xf32, #tpu.memory_space<vmem>>, %arg6: memref<1x16x256xf32, #tpu.memory_space<vmem>>) attributes {dimension_semantics = [#tpu.dimension_semantics<parallel>], iteration_bounds = array<i64: 2>, scalar_prefetch = 0 : i64, scratch_operands = 0 : i64, tpu.core_type = #tpu.core_type<tc>, window_params = [{transform_indices = @transform_0, window_bounds = array<i64: 1, 4, 256>}, {transform_indices = @transform_1, window_bounds = array<i64: 1, 5, 256>}, {pipeline_mode = #tpu.pipeline_mode<synchronous>, transform_indices = @transform_2, window_bounds = array<i64: 16, 25>}, {pipeline_mode = #tpu.pipeline_mode<synchronous>, transform_indices = @transform_3, window_bounds = array<i64: 16, 80>}, {pipeline_mode = #tpu.pipeline_mode<synchronous>, transform_indices = @transform_4, window_bounds = array<i64: 16, 2>}, {transform_indices = @transform_5, window_bounds = array<i64: 1, 16, 256>}]} {
    %c0 = arith.constant 0 : index
    %c0_0 = arith.constant 0 : index
    %c0_1 = arith.constant 0 : index
    %0 = vector.load %arg1[%c0, %c0_0, %c0_1] : memref<1x4x256xi32, #tpu.memory_space<vmem>>, vector<1x4x256xi32>
    %1 = vector.shape_cast %0 : vector<1x4x256xi32> to vector<4x256xi32>
    %2 = vector.extract_strided_slice %1 {offsets = [0, 0], sizes = [1, 256], strides = [1, 1]} : vector<4x256xi32> to vector<1x256xi32>
    %3 = tpu.iota {dimensions = array<i32: 0>} : vector<256x256xi32>
    %4 = vector.broadcast %2 : vector<1x256xi32> to vector<256x256xi32>
    %5 = arith.cmpi eq, %4, %3 : vector<256x256xi32>
    %6 = arith.extui %5 : vector<256x256xi1> to vector<256x256xi32>
    %7 = arith.sitofp %6 : vector<256x256xi32> to vector<256x256xf32>
    %8 = arith.truncf %7 : vector<256x256xf32> to vector<256x256xbf16>
    %9 = vector.extract_strided_slice %1 {offsets = [2, 0], sizes = [1, 256], strides = [1, 1]} : vector<4x256xi32> to vector<1x256xi32>
    %10 = tpu.iota {dimensions = array<i32: 0>} : vector<256x256xi32>
    %11 = vector.broadcast %9 : vector<1x256xi32> to vector<256x256xi32>
    %12 = arith.cmpi eq, %11, %10 : vector<256x256xi32>
    %13 = arith.extui %12 : vector<256x256xi1> to vector<256x256xi32>
    %14 = arith.sitofp %13 : vector<256x256xi32> to vector<256x256xf32>
    %15 = arith.truncf %14 : vector<256x256xf32> to vector<256x256xbf16>
    %16 = arith.addf %8, %15 : vector<256x256xbf16>
    %17 = arith.subf %8, %15 : vector<256x256xbf16>
    %18 = vector.extract_strided_slice %1 {offsets = [1, 0], sizes = [1, 256], strides = [1, 1]} : vector<4x256xi32> to vector<1x256xi32>
    %19 = tpu.iota {dimensions = array<i32: 0>} : vector<256x256xi32>
    %20 = vector.broadcast %18 : vector<1x256xi32> to vector<256x256xi32>
    %21 = arith.cmpi eq, %20, %19 : vector<256x256xi32>
    %22 = arith.extui %21 : vector<256x256xi1> to vector<256x256xi32>
    %23 = arith.sitofp %22 : vector<256x256xi32> to vector<256x256xf32>
    %24 = arith.truncf %23 : vector<256x256xf32> to vector<256x256xbf16>
    %25 = vector.extract_strided_slice %1 {offsets = [3, 0], sizes = [1, 256], strides = [1, 1]} : vector<4x256xi32> to vector<1x256xi32>
    %26 = tpu.iota {dimensions = array<i32: 0>} : vector<256x256xi32>
    %27 = vector.broadcast %25 : vector<1x256xi32> to vector<256x256xi32>
    %28 = arith.cmpi eq, %27, %26 : vector<256x256xi32>
    %29 = arith.extui %28 : vector<256x256xi1> to vector<256x256xi32>
    %30 = arith.sitofp %29 : vector<256x256xi32> to vector<256x256xf32>
    %31 = arith.truncf %30 : vector<256x256xf32> to vector<256x256xbf16>
    %32 = arith.addf %24, %31 : vector<256x256xbf16>
    %33 = arith.subf %24, %31 : vector<256x256xbf16>
    %34 = tpu.concatenate %16, %32, %17, %33 in 1 : vector<256x256xbf16>, vector<256x256xbf16>, vector<256x256xbf16>, vector<256x256xbf16> -> vector<256x1024xbf16>
    %c0_2 = arith.constant 0 : index
    %c0_3 = arith.constant 0 : index
    %c0_4 = arith.constant 0 : index
    %35 = vector.load %arg2[%c0_2, %c0_3, %c0_4] : memref<1x5x256xf32, #tpu.memory_space<vmem>>, vector<1x5x256xf32>
    %36 = vector.shape_cast %35 : vector<1x5x256xf32> to vector<5x256xf32>
    %37 = arith.truncf %36 : vector<5x256xf32> to vector<5x256xbf16>
    %cst = arith.constant dense<0.000000e+00> : vector<5x1024xf32>
    %38 = tpu.matmul %37, %34, %cst {dimension_numbers = #tpu.dot_dimension_numbers<[1], [0], [0], [1], [0, 0, 1, 1], [], []>} : vector<5x256xbf16>, vector<256x1024xbf16>, vector<5x1024xf32> -> vector<5x1024xf32>
    %39 = arith.truncf %38 : vector<5x1024xf32> to vector<5x1024xbf16>
    %40 = vector.extract_strided_slice %39 {offsets = [0, 0], sizes = [5, 256], strides = [1, 1]} : vector<5x1024xbf16> to vector<5x256xbf16>
    %41 = vector.extract_strided_slice %39 {offsets = [0, 256], sizes = [5, 256], strides = [1, 1]} : vector<5x1024xbf16> to vector<5x256xbf16>
    %42 = vector.extract_strided_slice %39 {offsets = [0, 512], sizes = [5, 256], strides = [1, 1]} : vector<5x1024xbf16> to vector<5x256xbf16>
    %43 = math.absf %42 : vector<5x256xbf16>
    %44 = vector.extract_strided_slice %39 {offsets = [0, 768], sizes = [5, 256], strides = [1, 1]} : vector<5x1024xbf16> to vector<5x256xbf16>
    %45 = math.absf %44 : vector<5x256xbf16>
    %46 = tpu.concatenate %37, %40, %41, %43, %45 in 0 : vector<5x256xbf16>, vector<5x256xbf16>, vector<5x256xbf16>, vector<5x256xbf16>, vector<5x256xbf16> -> vector<25x256xbf16>
    %c0_5 = arith.constant 0 : index
    %c0_6 = arith.constant 0 : index
    %47 = vector.load %arg3[%c0_5, %c0_6] : memref<16x25xbf16, #tpu.memory_space<vmem>>, vector<16x25xbf16>
    %cst_7 = arith.constant dense<0.000000e+00> : vector<16x256xf32>
    %48 = tpu.matmul %47, %46, %cst_7 {dimension_numbers = #tpu.dot_dimension_numbers<[1], [0], [0], [1], [0, 0, 1, 1], [], []>} : vector<16x25xbf16>, vector<25x256xbf16>, vector<16x256xf32> -> vector<16x256xf32>
    %c0_8 = arith.constant 0 : index
    %c0_9 = arith.constant 0 : index
    %49 = vector.load %arg5[%c0_8, %c0_9] : memref<16x2xf32, #tpu.memory_space<vmem>>, vector<16x1xf32>
    %50 = vector.broadcast %49 : vector<16x1xf32> to vector<16x256xf32>
    %51 = arith.addf %48, %50 : vector<16x256xf32>
    %52 = arith.truncf %51 : vector<16x256xf32> to vector<16x256xbf16>
    %cst_10 = arith.constant dense<0.000000e+00> : vector<16x1024xf32>
    %53 = tpu.matmul %52, %34, %cst_10 {dimension_numbers = #tpu.dot_dimension_numbers<[1], [0], [0], [1], [0, 0, 1, 1], [], []>} : vector<16x256xbf16>, vector<256x1024xbf16>, vector<16x1024xf32> -> vector<16x1024xf32>
    %54 = arith.truncf %53 : vector<16x1024xf32> to vector<16x1024xbf16>
    %55 = vector.extract_strided_slice %54 {offsets = [0, 0], sizes = [16, 256], strides = [1, 1]} : vector<16x1024xbf16> to vector<16x256xbf16>
    %56 = vector.extract_strided_slice %54 {offsets = [0, 256], sizes = [16, 256], strides = [1, 1]} : vector<16x1024xbf16> to vector<16x256xbf16>
    %57 = vector.extract_strided_slice %54 {offsets = [0, 512], sizes = [16, 256], strides = [1, 1]} : vector<16x1024xbf16> to vector<16x256xbf16>
    %58 = math.absf %57 : vector<16x256xbf16>
    %59 = vector.extract_strided_slice %54 {offsets = [0, 768], sizes = [16, 256], strides = [1, 1]} : vector<16x1024xbf16> to vector<16x256xbf16>
    %60 = math.absf %59 : vector<16x256xbf16>
    %61 = tpu.concatenate %52, %55, %56, %58, %60 in 0 : vector<16x256xbf16>, vector<16x256xbf16>, vector<16x256xbf16>, vector<16x256xbf16>, vector<16x256xbf16> -> vector<80x256xbf16>
    %c0_11 = arith.constant 0 : index
    %c0_12 = arith.constant 0 : index
    %62 = vector.load %arg4[%c0_11, %c0_12] : memref<16x80xbf16, #tpu.memory_space<vmem>>, vector<16x80xbf16>
    %cst_13 = arith.constant dense<0.000000e+00> : vector<16x256xf32>
    %63 = tpu.matmul %62, %61, %cst_13 {dimension_numbers = #tpu.dot_dimension_numbers<[1], [0], [0], [1], [0, 0, 1, 1], [], []>} : vector<16x80xbf16>, vector<80x256xbf16>, vector<16x256xf32> -> vector<16x256xf32>
    %c0_14 = arith.constant 0 : index
    %c1 = arith.constant 1 : index
    %64 = vector.load %arg5[%c0_14, %c1] : memref<16x2xf32, #tpu.memory_space<vmem>>, vector<16x1xf32>
    %65 = vector.broadcast %64 : vector<16x1xf32> to vector<16x256xf32>
    %66 = arith.addf %63, %65 : vector<16x256xf32>
    %c0_15 = arith.constant 0 : index
    %c0_16 = arith.constant 0 : index
    %c0_17 = arith.constant 0 : index
    %67 = vector.load %arg6[%c0_15, %c0_16, %c0_17] : memref<1x16x256xf32, #tpu.memory_space<vmem>>, vector<1x16x256xf32>
    %68 = vector.shape_cast %67 : vector<1x16x256xf32> to vector<16x256xf32>
    %69 = vector.shape_cast %66 : vector<16x256xf32> to vector<1x16x256xf32>
    tpu.vector_store %arg6[%c0_15, %c0_16, %c0_17], %69 {strides = array<i32>} : memref<1x16x256xf32, #tpu.memory_space<vmem>>, vector<1x16x256xf32>,
    return
  }
  func.func @transform_0(%arg0: i32) -> (i32, i32, i32) {
    %c0_i32 = arith.constant 0 : i32
    %c0_i32_0 = arith.constant 0 : i32
    %c0_i32_1 = arith.constant 0 : i32
    return %arg0, %c0_i32, %c0_i32_0 : i32, i32, i32
  }
  func.func @transform_1(%arg0: i32) -> (i32, i32, i32) {
    %c0_i32 = arith.constant 0 : i32
    %c0_i32_0 = arith.constant 0 : i32
    %c0_i32_1 = arith.constant 0 : i32
    return %arg0, %c0_i32, %c0_i32_0 : i32, i32, i32
  }
  func.func @transform_2(%arg0: i32) -> (i32, i32) {
    %c0_i32 = arith.constant 0 : i32
    %c0_i32_0 = arith.constant 0 : i32
    %c0_i32_1 = arith.constant 0 : i32
    return %c0_i32, %c0_i32_0 : i32, i32
  }
  func.func @transform_3(%arg0: i32) -> (i32, i32) {
    %c0_i32 = arith.constant 0 : i32
    %c0_i32_0 = arith.constant 0 : i32
    %c0_i32_1 = arith.constant 0 : i32
    return %c0_i32, %c0_i32_0 : i32, i32
  }
  func.func @transform_4(%arg0: i32) -> (i32, i32) {
    %c0_i32 = arith.constant 0 : i32
    %c0_i32_0 = arith.constant 0 : i32
    %c0_i32_1 = arith.constant 0 : i32
    return %c0_i32, %c0_i32_0 : i32, i32
  }
  func.func @transform_5(%arg0: i32) -> (i32, i32, i32) {
    %c0_i32 = arith.constant 0 : i32
    %c0_i32_0 = arith.constant 0 : i32
    %c0_i32_1 = arith.constant 0 : i32
    return %arg0, %c0_i32, %c0_i32_0 : i32, i32, i32
  }
}

</mosaic_0001>

<llo_original>
// kernel: tpu_custom_call.1
$region0: #{tpu_custom_call.1}
  #allocation0 [shape = 'u32[]', space=smem, size = 0x4, offset = 0x4, fixed_abs, tag = 'smem constant byte address 0x4 - core index']
  #allocation1 [shape = 'u32[144,128]{1,0:T(1,128)}', space=vmem, size = 0x12000, scoped, tag = 'internal scratch']
  %s0 = inlined_call_operand.vmem [shape: s32[2,4,256], index: 0, kind: input, shape index: {}]
  %s1 = inlined_call_operand.vmem [shape: f32[2,5,256], index: 1, kind: input, shape index: {}]
  %s2 = inlined_call_operand.vmem [shape: bf16[16,25], index: 2, kind: input, shape index: {}]
  %s3 = inlined_call_operand.vmem [shape: bf16[16,80], index: 3, kind: input, shape index: {}]
  %s4 = inlined_call_operand.vmem [shape: f32[16,2], index: 4, kind: input, shape index: {}]
  %s5 = inlined_call_operand.hbm [shape: f32[2,16,256], index: 5, kind: output, shape index: {}]
  %s6 = sld [smem:[#allocation0]]
  $region53: #{tpu_custom_call.1} parent=0
    _
  %s8 = ssub.s32 1, %s6
  %s9 = scalar_select 0, %s8, %s6
  $region1: #{tpu_custom_call.1} parent=0
    #allocation2 [shape = 'u8[32768]{0}', space=vmem, size = 0x8000, scoped, tag = 'output window, operand 0']
    #allocation3 [shape = 's32[2]{0}', space=sflag, size = 0x8, scoped, tag = 'scoped memory for tpu_custom_call.1']
    %10 = vsyncpa [#allocation3], 0
    %s11 = scalar_lea.sflag [#allocation3], 1
    %12 = vsyncpa %s11, 0
    loop: start=0, step=1, limit=4
    $region2: #{tpu_custom_call.1} parent=1 // loop_pre_header
      _
    $region3: #{tpu_custom_call.1} parent=1 // loop_header
      %s14 = sphi 0, %s18
      %p15 = scmp.ge.s32.totalorder %s14, 4
      %s24 = sphi 0, %s26
      %s27 = sphi 0, %s24
      %s28 = sphi 0, %s27
      %s44 = sphi 0, %s28
      %s50 = sphi 0, %s52
      %s53 = sphi 0, %s50
      %s54 = sphi 0, %s53
      %s70 = sphi 0, %s54
      %s74 = sphi 0, %s74
      %s76 = sphi 0, %s74
      %s77 = sphi 0, %s76
      %s91 = sphi 0, %s77
      %s95 = sphi 0, %s95
      %s97 = sphi 0, %s95
      %s98 = sphi 0, %s97
      %s112 = sphi 0, %s98
      %s116 = sphi 0, %s116
      %s118 = sphi 0, %s116
      %s119 = sphi 0, %s118
      %s133 = sphi 0, %s119
      %s139 = sphi 0, %s141
      %s142 = sphi 0, %s139
      %s143 = sphi 0, %s142
      %s159 = sphi 0, %s143
    $region4: #{tpu_custom_call.1} parent=1 // loop_header_branch
      %17 = sbr.rel (%p15) target = $region8
    $region5: #{tpu_custom_call.1} parent=1 // loop_body
      %s19 = ssub.s32 %s14, 1
      %s20 = ssub.s32 %s14, 2
      %s21 = sadd.s32 %s14, 1
      %s22 = ssub.s32 %s14, %s21
      %p23 = scmp.eq.s32.totalorder %s22, 0
      %s25 = sadd.s32 %s24, 1
      %s26 = scalar_select %p23, %s24, %s25
      %p29 = pneg %p23
      %p30 = scmp.eq.s32.totalorder %s14, 1
      %p31 = por %p29, %p30
      %p32 = scmp.ne.s32.totalorder %s24, %s27
      %p33 = scmp.eq.s32.totalorder %s14, 0
      %p34 = por %p32, %p33
      %p35 = scmp.ne.s32.totalorder %s24, %s27
      %p36 = scmp.eq.s32.totalorder %s19, 1
      %p37 = por %p35, %p36
      %p38 = scmp.ne.s32.totalorder %s27, %s28
      %p39 = scmp.eq.s32.totalorder %s19, 0
      %p40 = por %p38, %p39
      %p41 = scmp.ne.s32.totalorder %s27, %s28
      %p42 = scmp.eq.s32.totalorder %s20, 1
      %p43 = por %p41, %p42
      %p45 = scmp.ne.s32.totalorder %s28, %s44
      %p46 = scmp.eq.s32.totalorder %s20, 0
      %p47 = por %p45, %p46
      %s48 = ssub.s32 %s14, %s21
      %p49 = scmp.eq.s32.totalorder %s48, 0
      %s51 = sadd.s32 %s50, 1
      %s52 = scalar_select %p49, %s50, %s51
      %p55 = pneg %p49
      %p56 = scmp.eq.s32.totalorder %s14, 1
      %p57 = por %p55, %p56
      %p58 = scmp.ne.s32.totalorder %s50, %s53
      %p59 = scmp.eq.s32.totalorder %s14, 0
      %p60 = por %p58, %p59
      %p61 = scmp.ne.s32.totalorder %s50, %s53
      %p62 = scmp.eq.s32.totalorder %s19, 1
      %p63 = por %p61, %p62
      %p64 = scmp.ne.s32.totalorder %s53, %s54
      %p65 = scmp.eq.s32.totalorder %s19, 0
      %p66 = por %p64, %p65
      %p67 = scmp.ne.s32.totalorder %s53, %s54
      %p68 = scmp.eq.s32.totalorder %s20, 1
      %p69 = por %p67, %p68
      %p71 = scmp.ne.s32.totalorder %s54, %s70
      %p72 = scmp.eq.s32.totalorder %s20, 0
      %p73 = por %p71, %p72
      %s75 = sadd.s32 %s74, 1
      %p78 = scmp.eq.s32.totalorder %s14, 1
      %p79 = scmp.ne.s32.totalorder %s74, %s76
      %p80 = scmp.eq.s32.totalorder %s14, 0
      %p81 = por %p79, %p80
      %p82 = scmp.ne.s32.totalorder %s74, %s76
      %p83 = scmp.eq.s32.totalorder %s19, 1
      %p84 = por %p82, %p83
      %p85 = scmp.ne.s32.totalorder %s76, %s77
      %p86 = scmp.eq.s32.totalorder %s19, 0
      %p87 = por %p85, %p86
      %p88 = scmp.ne.s32.totalorder %s76, %s77
      %p89 = scmp.eq.s32.totalorder %s20, 1
      %p90 = por %p88, %p89
      %p92 = scmp.ne.s32.totalorder %s77, %s91
      %p93 = scmp.eq.s32.totalorder %s20, 0
      %p94 = por %p92, %p93
      %s96 = sadd.s32 %s95, 1
      %p99 = scmp.eq.s32.totalorder %s14, 1
      %p100 = scmp.ne.s32.totalorder %s95, %s97
      %p101 = scmp.eq.s32.totalorder %s14, 0
      %p102 = por %p100, %p101
      %p103 = scmp.ne.s32.totalorder %s95, %s97
      %p104 = scmp.eq.s32.totalorder %s19, 1
      %p105 = por %p103, %p104
      %p106 = scmp.ne.s32.totalorder %s97, %s98
      %p107 = scmp.eq.s32.totalorder %s19, 0
      %p108 = por %p106, %p107
      %p109 = scmp.ne.s32.totalorder %s97, %s98
      %p110 = scmp.eq.s32.totalorder %s20, 1
      %p111 = por %p109, %p110
      %p113 = scmp.ne.s32.totalorder %s98, %s112
      %p114 = scmp.eq.s32.totalorder %s20, 0
      %p115 = por %p113, %p114
      %s117 = sadd.s32 %s116, 1
      %p120 = scmp.eq.s32.totalorder %s14, 1
      %p121 = scmp.ne.s32.totalorder %s116, %s118
      %p122 = scmp.eq.s32.totalorder %s14, 0
      %p123 = por %p121, %p122
      %p124 = scmp.ne.s32.totalorder %s116, %s118
      %p125 = scmp.eq.s32.totalorder %s19, 1
      %p126 = por %p124, %p125
      %p127 = scmp.ne.s32.totalorder %s118, %s119
      %p128 = scmp.eq.s32.totalorder %s19, 0
      %p129 = por %p127, %p128
      %p130 = scmp.ne.s32.totalorder %s118, %s119
      %p131 = scmp.eq.s32.totalorder %s20, 1
      %p132 = por %p130, %p131
      %p134 = scmp.ne.s32.totalorder %s119, %s133
      %p135 = scmp.eq.s32.totalorder %s20, 0
      %p136 = por %p134, %p135
      %s137 = ssub.s32 %s14, %s21
      %p138 = scmp.eq.s32.totalorder %s137, 0
      %s140 = sadd.s32 %s139, 1
      %s141 = scalar_select %p138, %s139, %s140
      %p144 = pneg %p138
      %p145 = scmp.eq.s32.totalorder %s14, 1
      %p146 = por %p144, %p145
      %p147 = scmp.ne.s32.totalorder %s139, %s142
      %p148 = scmp.eq.s32.totalorder %s14, 0
      %p149 = por %p147, %p148
      %p150 = scmp.ne.s32.totalorder %s139, %s142
      %p151 = scmp.eq.s32.totalorder %s19, 1
      %p152 = por %p150, %p151
      %p153 = scmp.ne.s32.totalorder %s142, %s143
      %p154 = scmp.eq.s32.totalorder %s19, 0
      %p155 = por %p153, %p154
      %p156 = scmp.ne.s32.totalorder %s142, %s143
      %p157 = scmp.eq.s32.totalorder %s20, 1
      %p158 = por %p156, %p157
      %p160 = scmp.ne.s32.totalorder %s143, %s159
      %p161 = scmp.eq.s32.totalorder %s20, 0
      %p162 = por %p160, %p161
      %p163 = scmp.le.s32.totalorder 1, %s14
      %p164 = scmp.lt.s32.totalorder %s14, 3
      %p165 = pnand %p163, %p164
      %p166 = pneg %p165
      // Predicated region
      $region9: #{tpu_custom_call.1} parent=5 // pred_check
        _
      $region10: #{tpu_custom_call.1} parent=5 // pred_check_branch
        %168 = sbr.rel (%p165) target = $region12
      $region11: #{tpu_custom_call.1} parent=5 // pred_region
        %s169 = ssub.s32 %s14, 1
        // Predicated region
        $region13: #{tpu_custom_call.1} parent=11 // pred_check
          %p170 = pneg %p87
        $region14: #{tpu_custom_call.1} parent=11 // pred_check_branch
          %172 = sbr.rel (%p170) target = $region16
        $region15: #{tpu_custom_call.1} parent=11 // pred_region
          _
        $region16: #{tpu_custom_call.1} parent=11 // pred_fallthru
          _
        // Predicated region
        $region17: #{tpu_custom_call.1} parent=11 // pred_check
          %p173 = pneg %p108
        $region18: #{tpu_custom_call.1} parent=11 // pred_check_branch
          %175 = sbr.rel (%p173) target = $region20
        $region19: #{tpu_custom_call.1} parent=11 // pred_region
          _
        $region20: #{tpu_custom_call.1} parent=11 // pred_fallthru
          _
        // Predicated region
        $region21: #{tpu_custom_call.1} parent=11 // pred_check
          %p176 = pneg %p129
        $region22: #{tpu_custom_call.1} parent=11 // pred_check_branch
          %178 = sbr.rel (%p176) target = $region24
        $region23: #{tpu_custom_call.1} parent=11 // pred_region
          _
        $region24: #{tpu_custom_call.1} parent=11 // pred_fallthru
          _
      $region12: #{tpu_custom_call.1} parent=5 // pred_fallthru
        _
      %p179 = scmp.lt.s32.totalorder %s14, 2
      // Predicated region
      $region25: #{tpu_custom_call.1} parent=5 // pred_check
        %p180 = pneg %p179
      $region26: #{tpu_custom_call.1} parent=5 // pred_check_branch
        %182 = sbr.rel (%p180) target = $region28
      $region27: #{tpu_custom_call.1} parent=5 // pred_region
        // Predicated region
        $region29: #{tpu_custom_call.1} parent=27 // pred_check
          %p183 = pneg %p34
        $region30: #{tpu_custom_call.1} parent=27 // pred_check_branch
          %185 = sbr.rel (%p183) target = $region32
        $region31: #{tpu_custom_call.1} parent=27 // pred_region
          %p186 = scmp.lt.s32.totalorder %s14, 1
          %s187 = scalar_select %p186, %s14, 1
          %s188 = smul.addr %s187, 2
          %s189 = smul.addr %s188, 4
          %s190 = scalar_lea.vmem %s0, %s189
        $region32: #{tpu_custom_call.1} parent=27 // pred_fallthru
          _
        // Predicated region
        $region33: #{tpu_custom_call.1} parent=27 // pred_check
          %p191 = pneg %p60
        $region34: #{tpu_custom_call.1} parent=27 // pred_check_branch
          %193 = sbr.rel (%p191) target = $region36
        $region35: #{tpu_custom_call.1} parent=27 // pred_region
          %p194 = scmp.lt.s32.totalorder %s14, 1
          %s195 = scalar_select %p194, %s14, 1
          %s196 = smul.addr %s195, 2
          %s197 = smul.addr %s196, 8
          %s198 = scalar_lea.vmem %s1, %s197
        $region36: #{tpu_custom_call.1} parent=27 // pred_fallthru
          _
      $region28: #{tpu_custom_call.1} parent=5 // pred_fallthru
        _
      %p199 = scmp.le.s32.totalorder 1, %s14
      %p200 = scmp.lt.s32.totalorder %s14, 3
      %p201 = pnand %p199, %p200
      %p202 = pneg %p201
      // Predicated region
      $region37: #{tpu_custom_call.1} parent=5 // pred_check
        _
      $region38: #{tpu_custom_call.1} parent=5 // pred_check_branch
        %204 = sbr.rel (%p201) target = $region40
      $region39: #{tpu_custom_call.1} parent=5 // pred_region
        %s205 = ssub.s32 %s14, 1
        %p206 = scmp.lt.s32.totalorder %s19, 1
        %s207 = scalar_select %p206, %s19, 1
        %s208 = smul.addr %s207, 2
        %s209 = smul.addr %s208, 4
        %s210 = scalar_lea.vmem %s0, %s209
        %p211 = pneg %p40
        %p212 = pneg %p37
        %p213 = scmp.lt.s32.totalorder %s19, 1
        %s214 = scalar_select %p213, %s19, 1
        %s215 = smul.addr %s214, 2
        %s216 = smul.addr %s215, 8
        %s217 = scalar_lea.vmem %s1, %s216
        %p218 = pneg %p66
        %p219 = pneg %p63
        %p220 = pneg %p87
        %p221 = pneg %p84
        %p222 = pneg %p108
        %p223 = pneg %p105
        %p224 = pneg %p129
        %p225 = pneg %p126
        %p226 = pneg %p155
        %p227 = pneg %p152
        %s228 = sand.u32 %s142, 1
        %s229 = scalar_lea.sflag [#allocation3], %s228
        %s230 = sand.u32 %s142, 1
        %s231 = smul.addr %s230, 32
        %s232 = scalar_lea.vmem [#allocation2], %s231
        %p233 = scmp.lt.s32.totalorder %s19, 1
        %s234 = scalar_select %p233, %s19, 1
        %s235 = smul.addr %s234, 2
        %s236 = smul.addr %s235, 4
        %s237 = scalar_lea.vmem %s0, %s236
        %p238 = scmp.lt.s32.totalorder %s19, 1
        %s239 = scalar_select %p238, %s19, 1
        %s240 = smul.addr %s239, 2
        %s241 = smul.addr %s240, 8
        %s242 = scalar_lea.vmem %s1, %s241
        %v244 = vld [vmem:[%s237] sm:$0xff]
        %v245 = vlaneseq
        %v246 = vshrl.u32 %v245, 7
        %v247 = vadd.s32 %v246, 8
        %v248 = vadd.s32 %v246, 16
        %v249 = vadd.s32 %v246, 24
        %v250 = vadd.s32 %v246, 32
        %v251 = vadd.s32 %v246, 40
        %v252 = vadd.s32 %v246, 48
        %v253 = vadd.s32 %v246, 56
        %v254 = vadd.s32 %v246, 64
        %v255 = vadd.s32 %v246, 72
        %v256 = vadd.s32 %v246, 80
        %v257 = vadd.s32 %v246, 88
        %v258 = vadd.s32 %v246, 96
        %v259 = vadd.s32 %v246, 104
        %v260 = vadd.s32 %v246, 112
        %v261 = vadd.s32 %v246, 120
        %v262 = vadd.s32 %v246, 128
        %v263 = vadd.s32 %v246, 136
        %v264 = vadd.s32 %v246, 144
        %v265 = vadd.s32 %v246, 152
        %v266 = vadd.s32 %v246, 160
        %v267 = vadd.s32 %v246, 168
        %v268 = vadd.s32 %v246, 176
        %v269 = vadd.s32 %v246, 184
        %v270 = vadd.s32 %v246, 192
        %v271 = vadd.s32 %v246, 200
        %v272 = vadd.s32 %v246, 208
        %v273 = vadd.s32 %v246, 216
        %v274 = vadd.s32 %v246, 224
        %v275 = vadd.s32 %v246, 232
        %v276 = vadd.s32 %v246, 240
        %v277 = vadd.s32 %v246, 248
        %v278 = vlaneseq
        %v279 = vshrl.u32 %v278, 7
        %v280 = vsub.s32 0, %v279
        %v281 = vrot.slane %v244, %v280
        %v282 = vlaneseq
        %v283 = vshrl.u32 %v282, 7
        %v284 = vsub.s32 4, %v283
        %v285 = vrot.slane %v244, %v284
        %v286 = vlaneseq
        %v287 = vshrl.u32 %v286, 7
        %v288 = vsub.s32 0, %v287
        %v289 = vrot.slane %v281, %v288
        %v290 = vlaneseq
        %v291 = vshrl.u32 %v290, 7
        %v292 = vsub.s32 0, %v291
        %v293 = vrot.slane %v285, %v292
        %vm294 = vcmp.eq.s32.totalorder %v289, %v246
        %vm295 = vcmp.eq.s32.totalorder %v293, %v246
        %vm296 = vcmp.eq.s32.totalorder %v289, %v247
        %vm297 = vcmp.eq.s32.totalorder %v293, %v247
        %vm298 = vcmp.eq.s32.totalorder %v289, %v248
        %vm299 = vcmp.eq.s32.totalorder %v293, %v248
        %vm300 = vcmp.eq.s32.totalorder %v289, %v249
        %vm301 = vcmp.eq.s32.totalorder %v293, %v249
        %vm302 = vcmp.eq.s32.totalorder %v289, %v250
        %vm303 = vcmp.eq.s32.totalorder %v293, %v250
        %vm304 = vcmp.eq.s32.totalorder %v289, %v251
        %vm305 = vcmp.eq.s32.totalorder %v293, %v251
        %vm306 = vcmp.eq.s32.totalorder %v289, %v252
        %vm307 = vcmp.eq.s32.totalorder %v293, %v252
        %vm308 = vcmp.eq.s32.totalorder %v289, %v253
        %vm309 = vcmp.eq.s32.totalorder %v293, %v253
        %vm310 = vcmp.eq.s32.totalorder %v289, %v254
        %vm311 = vcmp.eq.s32.totalorder %v293, %v254
        %vm312 = vcmp.eq.s32.totalorder %v289, %v255
        %vm313 = vcmp.eq.s32.totalorder %v293, %v255
        %vm314 = vcmp.eq.s32.totalorder %v289, %v256
        %vm315 = vcmp.eq.s32.totalorder %v293, %v256
        %vm316 = vcmp.eq.s32.totalorder %v289, %v257
        %vm317 = vcmp.eq.s32.totalorder %v293, %v257
        %vm318 = vcmp.eq.s32.totalorder %v289, %v258
        %vm319 = vcmp.eq.s32.totalorder %v293, %v258
        %vm320 = vcmp.eq.s32.totalorder %v289, %v259
        %vm321 = vcmp.eq.s32.totalorder %v293, %v259
        %vm322 = vcmp.eq.s32.totalorder %v289, %v260
        %vm323 = vcmp.eq.s32.totalorder %v293, %v260
        %vm324 = vcmp.eq.s32.totalorder %v289, %v261
        %vm325 = vcmp.eq.s32.totalorder %v293, %v261
        %vm326 = vcmp.eq.s32.totalorder %v289, %v262
        %vm327 = vcmp.eq.s32.totalorder %v293, %v262
        %vm328 = vcmp.eq.s32.totalorder %v289, %v263
        %vm329 = vcmp.eq.s32.totalorder %v293, %v263
        %vm330 = vcmp.eq.s32.totalorder %v289, %v264
        %vm331 = vcmp.eq.s32.totalorder %v293, %v264
        %vm332 = vcmp.eq.s32.totalorder %v289, %v265
        %vm333 = vcmp.eq.s32.totalorder %v293, %v265
        %vm334 = vcmp.eq.s32.totalorder %v289, %v266
        %vm335 = vcmp.eq.s32.totalorder %v293, %v266
        %vm336 = vcmp.eq.s32.totalorder %v289, %v267
        %vm337 = vcmp.eq.s32.totalorder %v293, %v267
        %vm338 = vcmp.eq.s32.totalorder %v289, %v268
        %vm339 = vcmp.eq.s32.totalorder %v293, %v268
        %vm340 = vcmp.eq.s32.totalorder %v289, %v269
        %vm341 = vcmp.eq.s32.totalorder %v293, %v269
        %vm342 = vcmp.eq.s32.totalorder %v289, %v270
        %vm343 = vcmp.eq.s32.totalorder %v293, %v270
        %vm344 = vcmp.eq.s32.totalorder %v289, %v271
        %vm345 = vcmp.eq.s32.totalorder %v293, %v271
        %vm346 = vcmp.eq.s32.totalorder %v289, %v272
        %vm347 = vcmp.eq.s32.totalorder %v293, %v272
        %vm348 = vcmp.eq.s32.totalorder %v289, %v273
        %vm349 = vcmp.eq.s32.totalorder %v293, %v273
        %vm350 = vcmp.eq.s32.totalorder %v289, %v274
        %vm351 = vcmp.eq.s32.totalorder %v293, %v274
        %vm352 = vcmp.eq.s32.totalorder %v289, %v275
        %vm353 = vcmp.eq.s32.totalorder %v293, %v275
        %vm354 = vcmp.eq.s32.totalorder %v289, %v276
        %vm355 = vcmp.eq.s32.totalorder %v293, %v276
        %vm356 = vcmp.eq.s32.totalorder %v289, %v277
        %vm357 = vcmp.eq.s32.totalorder %v293, %v277
        %v358 = vsel %vm294, 1, 0
        %v359 = vsel %vm295, 1, 0
        %v360 = vsel %vm296, 1, 0
        %v361 = vsel %vm297, 1, 0
        %v362 = vsel %vm298, 1, 0
        %v363 = vsel %vm299, 1, 0
        %v364 = vsel %vm300, 1, 0
        %v365 = vsel %vm301, 1, 0
        %v366 = vsel %vm302, 1, 0
        %v367 = vsel %vm303, 1, 0
        %v368 = vsel %vm304, 1, 0
        %v369 = vsel %vm305, 1, 0
        %v370 = vsel %vm306, 1, 0
        %v371 = vsel %vm307, 1, 0
        %v372 = vsel %vm308, 1, 0
        %v373 = vsel %vm309, 1, 0
        %v374 = vsel %vm310, 1, 0
        %v375 = vsel %vm311, 1, 0
        %v376 = vsel %vm312, 1, 0
        %v377 = vsel %vm313, 1, 0
        %v378 = vsel %vm314, 1, 0
        %v379 = vsel %vm315, 1, 0
        %v380 = vsel %vm316, 1, 0
        %v381 = vsel %vm317, 1, 0
        %v382 = vsel %vm318, 1, 0
        %v383 = vsel %vm319, 1, 0
        %v384 = vsel %vm320, 1, 0
        %v385 = vsel %vm321, 1, 0
        %v386 = vsel %vm322, 1, 0
        %v387 = vsel %vm323, 1, 0
        %v388 = vsel %vm324, 1, 0
        %v389 = vsel %vm325, 1, 0
        %v390 = vsel %vm326, 1, 0
        %v391 = vsel %vm327, 1, 0
        %v392 = vsel %vm328, 1, 0
        %v393 = vsel %vm329, 1, 0
        %v394 = vsel %vm330, 1, 0
        %v395 = vsel %vm331, 1, 0
        %v396 = vsel %vm332, 1, 0
        %v397 = vsel %vm333, 1, 0
        %v398 = vsel %vm334, 1, 0
        %v399 = vsel %vm335, 1, 0
        %v400 = vsel %vm336, 1, 0
        %v401 = vsel %vm337, 1, 0
        %v402 = vsel %vm338, 1, 0
        %v403 = vsel %vm339, 1, 0
        %v404 = vsel %vm340, 1, 0
        %v405 = vsel %vm341, 1, 0
        %v406 = vsel %vm342, 1, 0
        %v407 = vsel %vm343, 1, 0
        %v408 = vsel %vm344, 1, 0
        %v409 = vsel %vm345, 1, 0
        %v410 = vsel %vm346, 1, 0
        %v411 = vsel %vm347, 1, 0
        %v412 = vsel %vm348, 1, 0
        %v413 = vsel %vm349, 1, 0
        %v414 = vsel %vm350, 1, 0
        %v415 = vsel %vm351, 1, 0
        %v416 = vsel %vm352, 1, 0
        %v417 = vsel %vm353, 1, 0
        %v418 = vsel %vm354, 1, 0
        %v419 = vsel %vm355, 1, 0
        %v420 = vsel %vm356, 1, 0
        %v421 = vsel %vm357, 1, 0
        %v422 = vcvt.s32.f32 %v358
        %v423 = vcvt.s32.f32 %v359
        %v424 = vcvt.s32.f32 %v360
        %v425 = vcvt.s32.f32 %v361
        %v426 = vcvt.s32.f32 %v362
        %v427 = vcvt.s32.f32 %v363
        %v428 = vcvt.s32.f32 %v364
        %v429 = vcvt.s32.f32 %v365
        %v430 = vcvt.s32.f32 %v366
        %v431 = vcvt.s32.f32 %v367
        %v432 = vcvt.s32.f32 %v368
        %v433 = vcvt.s32.f32 %v369
        %v434 = vcvt.s32.f32 %v370
        %v435 = vcvt.s32.f32 %v371
        %v436 = vcvt.s32.f32 %v372
        %v437 = vcvt.s32.f32 %v373
        %v438 = vcvt.s32.f32 %v374
        %v439 = vcvt.s32.f32 %v375
        %v440 = vcvt.s32.f32 %v376
        %v441 = vcvt.s32.f32 %v377
        %v442 = vcvt.s32.f32 %v378
        %v443 = vcvt.s32.f32 %v379
        %v444 = vcvt.s32.f32 %v380
        %v445 = vcvt.s32.f32 %v381
        %v446 = vcvt.s32.f32 %v382
        %v447 = vcvt.s32.f32 %v383
        %v448 = vcvt.s32.f32 %v384
        %v449 = vcvt.s32.f32 %v385
        %v450 = vcvt.s32.f32 %v386
        %v451 = vcvt.s32.f32 %v387
        %v452 = vcvt.s32.f32 %v388
        %v453 = vcvt.s32.f32 %v389
        %v454 = vcvt.s32.f32 %v390
        %v455 = vcvt.s32.f32 %v391
        %v456 = vcvt.s32.f32 %v392
        %v457 = vcvt.s32.f32 %v393
        %v458 = vcvt.s32.f32 %v394
        %v459 = vcvt.s32.f32 %v395
        %v460 = vcvt.s32.f32 %v396
        %v461 = vcvt.s32.f32 %v397
        %v462 = vcvt.s32.f32 %v398
        %v463 = vcvt.s32.f32 %v399
        %v464 = vcvt.s32.f32 %v400
        %v465 = vcvt.s32.f32 %v401
        %v466 = vcvt.s32.f32 %v402
        %v467 = vcvt.s32.f32 %v403
        %v468 = vcvt.s32.f32 %v404
        %v469 = vcvt.s32.f32 %v405
        %v470 = vcvt.s32.f32 %v406
        %v471 = vcvt.s32.f32 %v407
        %v472 = vcvt.s32.f32 %v408
        %v473 = vcvt.s32.f32 %v409
        %v474 = vcvt.s32.f32 %v410
        %v475 = vcvt.s32.f32 %v411
        %v476 = vcvt.s32.f32 %v412
        %v477 = vcvt.s32.f32 %v413
        %v478 = vcvt.s32.f32 %v414
        %v479 = vcvt.s32.f32 %v415
        %v480 = vcvt.s32.f32 %v416
        %v481 = vcvt.s32.f32 %v417
        %v482 = vcvt.s32.f32 %v418
        %v483 = vcvt.s32.f32 %v419
        %v484 = vcvt.s32.f32 %v420
        %v485 = vcvt.s32.f32 %v421
        %v486 = vpack.c.bf16 %v424, %v422
        %v487 = vpack.c.bf16 %v425, %v423
        %v488 = vpack.c.bf16 %v428, %v426
        %v489 = vpack.c.bf16 %v429, %v427
        %v490 = vpack.c.bf16 %v432, %v430
        %v491 = vpack.c.bf16 %v433, %v431
        %v492 = vpack.c.bf16 %v436, %v434
        %v493 = vpack.c.bf16 %v437, %v435
        %v494 = vpack.c.bf16 %v440, %v438
        %v495 = vpack.c.bf16 %v441, %v439
        %v496 = vpack.c.bf16 %v444, %v442
        %v497 = vpack.c.bf16 %v445, %v443
        %v498 = vpack.c.bf16 %v448, %v446
        %v499 = vpack.c.bf16 %v449, %v447
        %v500 = vpack.c.bf16 %v452, %v450
        %v501 = vpack.c.bf16 %v453, %v451
        %v502 = vpack.c.bf16 %v456, %v454
        %v503 = vpack.c.bf16 %v457, %v455
        %v504 = vpack.c.bf16 %v460, %v458
        %v505 = vpack.c.bf16 %v461, %v459
        %v506 = vpack.c.bf16 %v464, %v462
        %v507 = vpack.c.bf16 %v465, %v463
        %v508 = vpack.c.bf16 %v468, %v466
        %v509 = vpack.c.bf16 %v469, %v467
        %v510 = vpack.c.bf16 %v472, %v470
        %v511 = vpack.c.bf16 %v473, %v471
        %v512 = vpack.c.bf16 %v476, %v474
        %v513 = vpack.c.bf16 %v477, %v475
        %v514 = vpack.c.bf16 %v480, %v478
        %v515 = vpack.c.bf16 %v481, %v479
        %v516 = vpack.c.bf16 %v484, %v482
        %v517 = vpack.c.bf16 %v485, %v483
        %v518 = vlaneseq
        %v519 = vshrl.u32 %v518, 7
        %v520 = vsub.s32 2, %v519
        %v521 = vrot.slane %v244, %v520
        %v522 = vlaneseq
        %v523 = vshrl.u32 %v522, 7
        %v524 = vsub.s32 6, %v523
        %v525 = vrot.slane %v244, %v524
        %v526 = vlaneseq
        %v527 = vshrl.u32 %v526, 7
        %v528 = vsub.s32 2, %v527
        %v529 = vrot.slane %v521, %v528
        %v530 = vlaneseq
        %v531 = vshrl.u32 %v530, 7
        %v532 = vsub.s32 2, %v531
        %v533 = vrot.slane %v525, %v532
        %vm534 = vcmp.eq.s32.totalorder %v529, %v246
        %vm535 = vcmp.eq.s32.totalorder %v533, %v246
        %vm536 = vcmp.eq.s32.totalorder %v529, %v247
        %vm537 = vcmp.eq.s32.totalorder %v533, %v247
        %vm538 = vcmp.eq.s32.totalorder %v529, %v248
        %vm539 = vcmp.eq.s32.totalorder %v533, %v248
        %vm540 = vcmp.eq.s32.totalorder %v529, %v249
        %vm541 = vcmp.eq.s32.totalorder %v533, %v249
        %vm542 = vcmp.eq.s32.totalorder %v529, %v250
        %vm543 = vcmp.eq.s32.totalorder %v533, %v250
        %vm544 = vcmp.eq.s32.totalorder %v529, %v251
        %vm545 = vcmp.eq.s32.totalorder %v533, %v251
        %vm546 = vcmp.eq.s32.totalorder %v529, %v252
        %vm547 = vcmp.eq.s32.totalorder %v533, %v252
        %vm548 = vcmp.eq.s32.totalorder %v529, %v253
        %vm549 = vcmp.eq.s32.totalorder %v533, %v253
        %vm550 = vcmp.eq.s32.totalorder %v529, %v254
        %vm551 = vcmp.eq.s32.totalorder %v533, %v254
        %vm552 = vcmp.eq.s32.totalorder %v529, %v255
        %vm553 = vcmp.eq.s32.totalorder %v533, %v255
        %vm554 = vcmp.eq.s32.totalorder %v529, %v256
        %vm555 = vcmp.eq.s32.totalorder %v533, %v256
        %vm556 = vcmp.eq.s32.totalorder %v529, %v257
        %vm557 = vcmp.eq.s32.totalorder %v533, %v257
        %vm558 = vcmp.eq.s32.totalorder %v529, %v258
        %vm559 = vcmp.eq.s32.totalorder %v533, %v258
        %vm560 = vcmp.eq.s32.totalorder %v529, %v259
        %vm561 = vcmp.eq.s32.totalorder %v533, %v259
        %vm562 = vcmp.eq.s32.totalorder %v529, %v260
        %vm563 = vcmp.eq.s32.totalorder %v533, %v260
        %vm564 = vcmp.eq.s32.totalorder %v529, %v261
        %vm565 = vcmp.eq.s32.totalorder %v533, %v261
        %vm566 = vcmp.eq.s32.totalorder %v529, %v262
        %vm567 = vcmp.eq.s32.totalorder %v533, %v262
        %vm568 = vcmp.eq.s32.totalorder %v529, %v263
        %vm569 = vcmp.eq.s32.totalorder %v533, %v263
        %vm570 = vcmp.eq.s32.totalorder %v529, %v264
        %vm571 = vcmp.eq.s32.totalorder %v533, %v264
        %vm572 = vcmp.eq.s32.totalorder %v529, %v265
        %vm573 = vcmp.eq.s32.totalorder %v533, %v265
        %vm574 = vcmp.eq.s32.totalorder %v529, %v266
        %vm575 = vcmp.eq.s32.totalorder %v533, %v266
        %vm576 = vcmp.eq.s32.totalorder %v529, %v267
        %vm577 = vcmp.eq.s32.totalorder %v533, %v267
        %vm578 = vcmp.eq.s32.totalorder %v529, %v268
        %vm579 = vcmp.eq.s32.totalorder %v533, %v268
        %vm580 = vcmp.eq.s32.totalorder %v529, %v269
        %vm581 = vcmp.eq.s32.totalorder %v533, %v269
        %vm582 = vcmp.eq.s32.totalorder %v529, %v270
        %vm583 = vcmp.eq.s32.totalorder %v533, %v270
        %vm584 = vcmp.eq.s32.totalorder %v529, %v271
        %vm585 = vcmp.eq.s32.totalorder %v533, %v271
        %vm586 = vcmp.eq.s32.totalorder %v529, %v272
        %vm587 = vcmp.eq.s32.totalorder %v533, %v272
        %vm588 = vcmp.eq.s32.totalorder %v529, %v273
        %vm589 = vcmp.eq.s32.totalorder %v533, %v273
        %vm590 = vcmp.eq.s32.totalorder %v529, %v274
        %vm591 = vcmp.eq.s32.totalorder %v533, %v274
        %vm592 = vcmp.eq.s32.totalorder %v529, %v275
        %vm593 = vcmp.eq.s32.totalorder %v533, %v275
        %vm594 = vcmp.eq.s32.totalorder %v529, %v276
        %vm595 = vcmp.eq.s32.totalorder %v533, %v276
        %vm596 = vcmp.eq.s32.totalorder %v529, %v277
        %vm597 = vcmp.eq.s32.totalorder %v533, %v277
        %v598 = vsel %vm534, 1, 0
        %v599 = vsel %vm535, 1, 0
        %v600 = vsel %vm536, 1, 0
        %v601 = vsel %vm537, 1, 0
        %v602 = vsel %vm538, 1, 0
        %v603 = vsel %vm539, 1, 0
        %v604 = vsel %vm540, 1, 0
        %v605 = vsel %vm541, 1, 0
        %v606 = vsel %vm542, 1, 0
        %v607 = vsel %vm543, 1, 0
        %v608 = vsel %vm544, 1, 0
        %v609 = vsel %vm545, 1, 0
        %v610 = vsel %vm546, 1, 0
        %v611 = vsel %vm547, 1, 0
        %v612 = vsel %vm548, 1, 0
        %v613 = vsel %vm549, 1, 0
        %v614 = vsel %vm550, 1, 0
        %v615 = vsel %vm551, 1, 0
        %v616 = vsel %vm552, 1, 0
        %v617 = vsel %vm553, 1, 0
        %v618 = vsel %vm554, 1, 0
        %v619 = vsel %vm555, 1, 0
        %v620 = vsel %vm556, 1, 0
        %v621 = vsel %vm557, 1, 0
        %v622 = vsel %vm558, 1, 0
        %v623 = vsel %vm559, 1, 0
        %v624 = vsel %vm560, 1, 0
        %v625 = vsel %vm561, 1, 0
        %v626 = vsel %vm562, 1, 0
        %v627 = vsel %vm563, 1, 0
        %v628 = vsel %vm564, 1, 0
        %v629 = vsel %vm565, 1, 0
        %v630 = vsel %vm566, 1, 0
        %v631 = vsel %vm567, 1, 0
        %v632 = vsel %vm568, 1, 0
        %v633 = vsel %vm569, 1, 0
        %v634 = vsel %vm570, 1, 0
        %v635 = vsel %vm571, 1, 0
        %v636 = vsel %vm572, 1, 0
        %v637 = vsel %vm573, 1, 0
        %v638 = vsel %vm574, 1, 0
        %v639 = vsel %vm575, 1, 0
        %v640 = vsel %vm576, 1, 0
        %v641 = vsel %vm577, 1, 0
        %v642 = vsel %vm578, 1, 0
        %v643 = vsel %vm579, 1, 0
        %v644 = vsel %vm580, 1, 0
        %v645 = vsel %vm581, 1, 0
        %v646 = vsel %vm582, 1, 0
        %v647 = vsel %vm583, 1, 0
        %v648 = vsel %vm584, 1, 0
        %v649 = vsel %vm585, 1, 0
        %v650 = vsel %vm586, 1, 0
        %v651 = vsel %vm587, 1, 0
        %v652 = vsel %vm588, 1, 0
        %v653 = vsel %vm589, 1, 0
        %v654 = vsel %vm590, 1, 0
        %v655 = vsel %vm591, 1, 0
        %v656 = vsel %vm592, 1, 0
        %v657 = vsel %vm593, 1, 0
        %v658 = vsel %vm594, 1, 0
        %v659 = vsel %vm595, 1, 0
        %v660 = vsel %vm596, 1, 0
        %v661 = vsel %vm597, 1, 0
        %v662 = vcvt.s32.f32 %v598
        %v663 = vcvt.s32.f32 %v599
        %v664 = vcvt.s32.f32 %v600
        %v665 = vcvt.s32.f32 %v601
        %v666 = vcvt.s32.f32 %v602
        %v667 = vcvt.s32.f32 %v603
        %v668 = vcvt.s32.f32 %v604
        %v669 = vcvt.s32.f32 %v605
        %v670 = vcvt.s32.f32 %v606
        %v671 = vcvt.s32.f32 %v607
        %v672 = vcvt.s32.f32 %v608
        %v673 = vcvt.s32.f32 %v609
        %v674 = vcvt.s32.f32 %v610
        %v675 = vcvt.s32.f32 %v611
        %v676 = vcvt.s32.f32 %v612
        %v677 = vcvt.s32.f32 %v613
        %v678 = vcvt.s32.f32 %v614
        %v679 = vcvt.s32.f32 %v615
        %v680 = vcvt.s32.f32 %v616
        %v681 = vcvt.s32.f32 %v617
        %v682 = vcvt.s32.f32 %v618
        %v683 = vcvt.s32.f32 %v619
        %v684 = vcvt.s32.f32 %v620
        %v685 = vcvt.s32.f32 %v621
        %v686 = vcvt.s32.f32 %v622
        %v687 = vcvt.s32.f32 %v623
        %v688 = vcvt.s32.f32 %v624
        %v689 = vcvt.s32.f32 %v625
        %v690 = vcvt.s32.f32 %v626
        %v691 = vcvt.s32.f32 %v627
        %v692 = vcvt.s32.f32 %v628
        %v693 = vcvt.s32.f32 %v629
        %v694 = vcvt.s32.f32 %v630
        %v695 = vcvt.s32.f32 %v631
        %v696 = vcvt.s32.f32 %v632
        %v697 = vcvt.s32.f32 %v633
        %v698 = vcvt.s32.f32 %v634
        %v699 = vcvt.s32.f32 %v635
        %v700 = vcvt.s32.f32 %v636
        %v701 = vcvt.s32.f32 %v637
        %v702 = vcvt.s32.f32 %v638
        %v703 = vcvt.s32.f32 %v639
        %v704 = vcvt.s32.f32 %v640
        %v705 = vcvt.s32.f32 %v641
        %v706 = vcvt.s32.f32 %v642
        %v707 = vcvt.s32.f32 %v643
        %v708 = vcvt.s32.f32 %v644
        %v709 = vcvt.s32.f32 %v645
        %v710 = vcvt.s32.f32 %v646
        %v711 = vcvt.s32.f32 %v647
        %v712 = vcvt.s32.f32 %v648
        %v713 = vcvt.s32.f32 %v649
        %v714 = vcvt.s32.f32 %v650
        %v715 = vcvt.s32.f32 %v651
        %v716 = vcvt.s32.f32 %v652
        %v717 = vcvt.s32.f32 %v653
        %v718 = vcvt.s32.f32 %v654
        %v719 = vcvt.s32.f32 %v655
        %v720 = vcvt.s32.f32 %v656
        %v721 = vcvt.s32.f32 %v657
        %v722 = vcvt.s32.f32 %v658
        %v723 = vcvt.s32.f32 %v659
        %v724 = vcvt.s32.f32 %v660
        %v725 = vcvt.s32.f32 %v661
        %v726 = vpack.c.bf16 %v664, %v662
        %v727 = vpack.c.bf16 %v665, %v663
        %v728 = vpack.c.bf16 %v668, %v666
        %v729 = vpack.c.bf16 %v669, %v667
        %v730 = vpack.c.bf16 %v672, %v670
        %v731 = vpack.c.bf16 %v673, %v671
        %v732 = vpack.c.bf16 %v676, %v674
        %v733 = vpack.c.bf16 %v677, %v675
        %v734 = vpack.c.bf16 %v680, %v678
        %v735 = vpack.c.bf16 %v681, %v679
        %v736 = vpack.c.bf16 %v684, %v682
        %v737 = vpack.c.bf16 %v685, %v683
        %v738 = vpack.c.bf16 %v688, %v686
        %v739 = vpack.c.bf16 %v689, %v687
        %v740 = vpack.c.bf16 %v692, %v690
        %v741 = vpack.c.bf16 %v693, %v691
        %v742 = vpack.c.bf16 %v696, %v694
        %v743 = vpack.c.bf16 %v697, %v695
        %v744 = vpack.c.bf16 %v700, %v698
        %v745 = vpack.c.bf16 %v701, %v699
        %v746 = vpack.c.bf16 %v704, %v702
        %v747 = vpack.c.bf16 %v705, %v703
        %v748 = vpack.c.bf16 %v708, %v706
        %v749 = vpack.c.bf16 %v709, %v707
        %v750 = vpack.c.bf16 %v712, %v710
        %v751 = vpack.c.bf16 %v713, %v711
        %v752 = vpack.c.bf16 %v716, %v714
        %v753 = vpack.c.bf16 %v717, %v715
        %v754 = vpack.c.bf16 %v720, %v718
        %v755 = vpack.c.bf16 %v721, %v719
        %v756 = vpack.c.bf16 %v724, %v722
        %v757 = vpack.c.bf16 %v725, %v723
        %v758 = vadd.bf16 %v486, %v726
        %v759 = vadd.bf16 %v487, %v727
        %v760 = vadd.bf16 %v488, %v728
        %v761 = vadd.bf16 %v489, %v729
        %v762 = vadd.bf16 %v490, %v730
        %v763 = vadd.bf16 %v491, %v731
        %v764 = vadd.bf16 %v492, %v732
        %v765 = vadd.bf16 %v493, %v733
        %v766 = vadd.bf16 %v494, %v734
        %v767 = vadd.bf16 %v495, %v735
        %v768 = vadd.bf16 %v496, %v736
        %v769 = vadd.bf16 %v497, %v737
        %v770 = vadd.bf16 %v498, %v738
        %v771 = vadd.bf16 %v499, %v739
        %v772 = vadd.bf16 %v500, %v740
        %v773 = vadd.bf16 %v501, %v741
        %v774 = vadd.bf16 %v502, %v742
        %v775 = vadd.bf16 %v503, %v743
        %v776 = vadd.bf16 %v504, %v744
        %v777 = vadd.bf16 %v505, %v745
        %v778 = vadd.bf16 %v506, %v746
        %v779 = vadd.bf16 %v507, %v747
        %v780 = vadd.bf16 %v508, %v748
        %v781 = vadd.bf16 %v509, %v749
        %v782 = vadd.bf16 %v510, %v750
        %v783 = vadd.bf16 %v511, %v751
        %v784 = vadd.bf16 %v512, %v752
        %v785 = vadd.bf16 %v513, %v753
        %v786 = vadd.bf16 %v514, %v754
        %v787 = vadd.bf16 %v515, %v755
        %v788 = vadd.bf16 %v516, %v756
        %v789 = vadd.bf16 %v517, %v757
        %v790 = vsub.bf16 %v486, %v726
        %v791 = vsub.bf16 %v487, %v727
        %v792 = vsub.bf16 %v488, %v728
        %v793 = vsub.bf16 %v489, %v729
        %v794 = vsub.bf16 %v490, %v730
        %v795 = vsub.bf16 %v491, %v731
        %v796 = vsub.bf16 %v492, %v732
        %v797 = vsub.bf16 %v493, %v733
        %v798 = vsub.bf16 %v494, %v734
        %v799 = vsub.bf16 %v495, %v735
        %v800 = vsub.bf16 %v496, %v736
        %v801 = vsub.bf16 %v497, %v737
        %v802 = vsub.bf16 %v498, %v738
        %v803 = vsub.bf16 %v499, %v739
        %v804 = vsub.bf16 %v500, %v740
        %v805 = vsub.bf16 %v501, %v741
        %v806 = vsub.bf16 %v502, %v742
        %v807 = vsub.bf16 %v503, %v743
        %v808 = vsub.bf16 %v504, %v744
        %v809 = vsub.bf16 %v505, %v745
        %v810 = vsub.bf16 %v506, %v746
        %v811 = vsub.bf16 %v507, %v747
        %v812 = vsub.bf16 %v508, %v748
        %v813 = vsub.bf16 %v509, %v749
        %v814 = vsub.bf16 %v510, %v750
        %v815 = vsub.bf16 %v511, %v751
        %v816 = vsub.bf16 %v512, %v752
        %v817 = vsub.bf16 %v513, %v753
        %v818 = vsub.bf16 %v514, %v754
        %v819 = vsub.bf16 %v515, %v755
        %v820 = vsub.bf16 %v516, %v756
        %v821 = vsub.bf16 %v517, %v757
        %v822 = vlaneseq
        %v823 = vshrl.u32 %v822, 7
        %v824 = vsub.s32 1, %v823
        %v825 = vrot.slane %v244, %v824
        %v826 = vlaneseq
        %v827 = vshrl.u32 %v826, 7
        %v828 = vsub.s32 5, %v827
        %v829 = vrot.slane %v244, %v828
        %v830 = vlaneseq
        %v831 = vshrl.u32 %v830, 7
        %v832 = vsub.s32 1, %v831
        %v833 = vrot.slane %v825, %v832
        %v834 = vlaneseq
        %v835 = vshrl.u32 %v834, 7
        %v836 = vsub.s32 1, %v835
        %v837 = vrot.slane %v829, %v836
        %vm838 = vcmp.eq.s32.totalorder %v833, %v246
        %vm839 = vcmp.eq.s32.totalorder %v837, %v246
        %vm840 = vcmp.eq.s32.totalorder %v833, %v247
        %vm841 = vcmp.eq.s32.totalorder %v837, %v247
        %vm842 = vcmp.eq.s32.totalorder %v833, %v248
        %vm843 = vcmp.eq.s32.totalorder %v837, %v248
        %vm844 = vcmp.eq.s32.totalorder %v833, %v249
        %vm845 = vcmp.eq.s32.totalorder %v837, %v249
        %vm846 = vcmp.eq.s32.totalorder %v833, %v250
        %vm847 = vcmp.eq.s32.totalorder %v837, %v250
        %vm848 = vcmp.eq.s32.totalorder %v833, %v251
        %vm849 = vcmp.eq.s32.totalorder %v837, %v251
        %vm850 = vcmp.eq.s32.totalorder %v833, %v252
        %vm851 = vcmp.eq.s32.totalorder %v837, %v252
        %vm852 = vcmp.eq.s32.totalorder %v833, %v253
        %vm853 = vcmp.eq.s32.totalorder %v837, %v253
        %vm854 = vcmp.eq.s32.totalorder %v833, %v254
        %vm855 = vcmp.eq.s32.totalorder %v837, %v254
        %vm856 = vcmp.eq.s32.totalorder %v833, %v255
        %vm857 = vcmp.eq.s32.totalorder %v837, %v255
        %vm858 = vcmp.eq.s32.totalorder %v833, %v256
        %vm859 = vcmp.eq.s32.totalorder %v837, %v256
        %vm860 = vcmp.eq.s32.totalorder %v833, %v257
        %vm861 = vcmp.eq.s32.totalorder %v837, %v257
        %vm862 = vcmp.eq.s32.totalorder %v833, %v258
        %vm863 = vcmp.eq.s32.totalorder %v837, %v258
        %vm864 = vcmp.eq.s32.totalorder %v833, %v259
        %vm865 = vcmp.eq.s32.totalorder %v837, %v259
        %vm866 = vcmp.eq.s32.totalorder %v833, %v260
        %vm867 = vcmp.eq.s32.totalorder %v837, %v260
        %vm868 = vcmp.eq.s32.totalorder %v833, %v261
        %vm869 = vcmp.eq.s32.totalorder %v837, %v261
        %vm870 = vcmp.eq.s32.totalorder %v833, %v262
        %vm871 = vcmp.eq.s32.totalorder %v837, %v262
        %vm872 = vcmp.eq.s32.totalorder %v833, %v263
        %vm873 = vcmp.eq.s32.totalorder %v837, %v263
        %vm874 = vcmp.eq.s32.totalorder %v833, %v264
        %vm875 = vcmp.eq.s32.totalorder %v837, %v264
        %vm876 = vcmp.eq.s32.totalorder %v833, %v265
        %vm877 = vcmp.eq.s32.totalorder %v837, %v265
        %vm878 = vcmp.eq.s32.totalorder %v833, %v266
        %vm879 = vcmp.eq.s32.totalorder %v837, %v266
        %vm880 = vcmp.eq.s32.totalorder %v833, %v267
        %vm881 = vcmp.eq.s32.totalorder %v837, %v267
        %vm882 = vcmp.eq.s32.totalorder %v833, %v268
        %vm883 = vcmp.eq.s32.totalorder %v837, %v268
        %vm884 = vcmp.eq.s32.totalorder %v833, %v269
        %vm885 = vcmp.eq.s32.totalorder %v837, %v269
        %vm886 = vcmp.eq.s32.totalorder %v833, %v270
        %vm887 = vcmp.eq.s32.totalorder %v837, %v270
        %vm888 = vcmp.eq.s32.totalorder %v833, %v271
        %vm889 = vcmp.eq.s32.totalorder %v837, %v271
        %vm890 = vcmp.eq.s32.totalorder %v833, %v272
        %vm891 = vcmp.eq.s32.totalorder %v837, %v272
        %vm892 = vcmp.eq.s32.totalorder %v833, %v273
        %vm893 = vcmp.eq.s32.totalorder %v837, %v273
        %vm894 = vcmp.eq.s32.totalorder %v833, %v274
        %vm895 = vcmp.eq.s32.totalorder %v837, %v274
        %vm896 = vcmp.eq.s32.totalorder %v833, %v275
        %vm897 = vcmp.eq.s32.totalorder %v837, %v275
        %vm898 = vcmp.eq.s32.totalorder %v833, %v276
        %vm899 = vcmp.eq.s32.totalorder %v837, %v276
        %vm900 = vcmp.eq.s32.totalorder %v833, %v277
        %vm901 = vcmp.eq.s32.totalorder %v837, %v277
        %v902 = vsel %vm838, 1, 0
        %v903 = vsel %vm839, 1, 0
        %v904 = vsel %vm840, 1, 0
        %v905 = vsel %vm841, 1, 0
        %v906 = vsel %vm842, 1, 0
        %v907 = vsel %vm843, 1, 0
        %v908 = vsel %vm844, 1, 0
        %v909 = vsel %vm845, 1, 0
        %v910 = vsel %vm846, 1, 0
        %v911 = vsel %vm847, 1, 0
        %v912 = vsel %vm848, 1, 0
        %v913 = vsel %vm849, 1, 0
        %v914 = vsel %vm850, 1, 0
        %v915 = vsel %vm851, 1, 0
        %v916 = vsel %vm852, 1, 0
        %v917 = vsel %vm853, 1, 0
        %v918 = vsel %vm854, 1, 0
        %v919 = vsel %vm855, 1, 0
        %v920 = vsel %vm856, 1, 0
        %v921 = vsel %vm857, 1, 0
        %v922 = vsel %vm858, 1, 0
        %v923 = vsel %vm859, 1, 0
        %v924 = vsel %vm860, 1, 0
        %v925 = vsel %vm861, 1, 0
        %v926 = vsel %vm862, 1, 0
        %v927 = vsel %vm863, 1, 0
        %v928 = vsel %vm864, 1, 0
        %v929 = vsel %vm865, 1, 0
        %v930 = vsel %vm866, 1, 0
        %v931 = vsel %vm867, 1, 0
        %v932 = vsel %vm868, 1, 0
        %v933 = vsel %vm869, 1, 0
        %v934 = vsel %vm870, 1, 0
        %v935 = vsel %vm871, 1, 0
        %v936 = vsel %vm872, 1, 0
        %v937 = vsel %vm873, 1, 0
        %v938 = vsel %vm874, 1, 0
        %v939 = vsel %vm875, 1, 0
        %v940 = vsel %vm876, 1, 0
        %v941 = vsel %vm877, 1, 0
        %v942 = vsel %vm878, 1, 0
        %v943 = vsel %vm879, 1, 0
        %v944 = vsel %vm880, 1, 0
        %v945 = vsel %vm881, 1, 0
        %v946 = vsel %vm882, 1, 0
        %v947 = vsel %vm883, 1, 0
        %v948 = vsel %vm884, 1, 0
        %v949 = vsel %vm885, 1, 0
        %v950 = vsel %vm886, 1, 0
        %v951 = vsel %vm887, 1, 0
        %v952 = vsel %vm888, 1, 0
        %v953 = vsel %vm889, 1, 0
        %v954 = vsel %vm890, 1, 0
        %v955 = vsel %vm891, 1, 0
        %v956 = vsel %vm892, 1, 0
        %v957 = vsel %vm893, 1, 0
        %v958 = vsel %vm894, 1, 0
        %v959 = vsel %vm895, 1, 0
        %v960 = vsel %vm896, 1, 0
        %v961 = vsel %vm897, 1, 0
        %v962 = vsel %vm898, 1, 0
        %v963 = vsel %vm899, 1, 0
        %v964 = vsel %vm900, 1, 0
        %v965 = vsel %vm901, 1, 0
        %v966 = vcvt.s32.f32 %v902
        %v967 = vcvt.s32.f32 %v903
        %v968 = vcvt.s32.f32 %v904
        %v969 = vcvt.s32.f32 %v905
        %v970 = vcvt.s32.f32 %v906
        %v971 = vcvt.s32.f32 %v907
        %v972 = vcvt.s32.f32 %v908
        %v973 = vcvt.s32.f32 %v909
        %v974 = vcvt.s32.f32 %v910
        %v975 = vcvt.s32.f32 %v911
        %v976 = vcvt.s32.f32 %v912
        %v977 = vcvt.s32.f32 %v913
        %v978 = vcvt.s32.f32 %v914
        %v979 = vcvt.s32.f32 %v915
        %v980 = vcvt.s32.f32 %v916
        %v981 = vcvt.s32.f32 %v917
        %v982 = vcvt.s32.f32 %v918
        %v983 = vcvt.s32.f32 %v919
        %v984 = vcvt.s32.f32 %v920
        %v985 = vcvt.s32.f32 %v921
        %v986 = vcvt.s32.f32 %v922
        %v987 = vcvt.s32.f32 %v923
        %v988 = vcvt.s32.f32 %v924
        %v989 = vcvt.s32.f32 %v925
        %v990 = vcvt.s32.f32 %v926
        %v991 = vcvt.s32.f32 %v927
        %v992 = vcvt.s32.f32 %v928
        %v993 = vcvt.s32.f32 %v929
        %v994 = vcvt.s32.f32 %v930
        %v995 = vcvt.s32.f32 %v931
        %v996 = vcvt.s32.f32 %v932
        %v997 = vcvt.s32.f32 %v933
        %v998 = vcvt.s32.f32 %v934
        %v999 = vcvt.s32.f32 %v935
        %v1000 = vcvt.s32.f32 %v936
        %v1001 = vcvt.s32.f32 %v937
        %v1002 = vcvt.s32.f32 %v938
        %v1003 = vcvt.s32.f32 %v939
        %v1004 = vcvt.s32.f32 %v940
        %v1005 = vcvt.s32.f32 %v941
        %v1006 = vcvt.s32.f32 %v942
        %v1007 = vcvt.s32.f32 %v943
        %v1008 = vcvt.s32.f32 %v944
        %v1009 = vcvt.s32.f32 %v945
        %v1010 = vcvt.s32.f32 %v946
        %v1011 = vcvt.s32.f32 %v947
        %v1012 = vcvt.s32.f32 %v948
        %v1013 = vcvt.s32.f32 %v949
        %v1014 = vcvt.s32.f32 %v950
        %v1015 = vcvt.s32.f32 %v951
        %v1016 = vcvt.s32.f32 %v952
        %v1017 = vcvt.s32.f32 %v953
        %v1018 = vcvt.s32.f32 %v954
        %v1019 = vcvt.s32.f32 %v955
        %v1020 = vcvt.s32.f32 %v956
        %v1021 = vcvt.s32.f32 %v957
        %v1022 = vcvt.s32.f32 %v958
        %v1023 = vcvt.s32.f32 %v959
        %v1024 = vcvt.s32.f32 %v960
        %v1025 = vcvt.s32.f32 %v961
        %v1026 = vcvt.s32.f32 %v962
        %v1027 = vcvt.s32.f32 %v963
        %v1028 = vcvt.s32.f32 %v964
        %v1029 = vcvt.s32.f32 %v965
        %v1030 = vpack.c.bf16 %v968, %v966
        %v1031 = vpack.c.bf16 %v969, %v967
        %v1032 = vpack.c.bf16 %v972, %v970
        %v1033 = vpack.c.bf16 %v973, %v971
        %v1034 = vpack.c.bf16 %v976, %v974
        %v1035 = vpack.c.bf16 %v977, %v975
        %v1036 = vpack.c.bf16 %v980, %v978
        %v1037 = vpack.c.bf16 %v981, %v979
        %v1038 = vpack.c.bf16 %v984, %v982
        %v1039 = vpack.c.bf16 %v985, %v983
        %v1040 = vpack.c.bf16 %v988, %v986
        %v1041 = vpack.c.bf16 %v989, %v987
        %v1042 = vpack.c.bf16 %v992, %v990
        %v1043 = vpack.c.bf16 %v993, %v991
        %v1044 = vpack.c.bf16 %v996, %v994
        %v1045 = vpack.c.bf16 %v997, %v995
        %v1046 = vpack.c.bf16 %v1000, %v998
        %v1047 = vpack.c.bf16 %v1001, %v999
        %v1048 = vpack.c.bf16 %v1004, %v1002
        %v1049 = vpack.c.bf16 %v1005, %v1003
        %v1050 = vpack.c.bf16 %v1008, %v1006
        %v1051 = vpack.c.bf16 %v1009, %v1007
        %v1052 = vpack.c.bf16 %v1012, %v1010
        %v1053 = vpack.c.bf16 %v1013, %v1011
        %v1054 = vpack.c.bf16 %v1016, %v1014
        %v1055 = vpack.c.bf16 %v1017, %v1015
        %v1056 = vpack.c.bf16 %v1020, %v1018
        %v1057 = vpack.c.bf16 %v1021, %v1019
        %v1058 = vpack.c.bf16 %v1024, %v1022
        %v1059 = vpack.c.bf16 %v1025, %v1023
        %v1060 = vpack.c.bf16 %v1028, %v1026
        %v1061 = vpack.c.bf16 %v1029, %v1027
        %v1062 = vlaneseq
        %v1063 = vshrl.u32 %v1062, 7
        %v1064 = vsub.s32 3, %v1063
        %v1065 = vrot.slane %v244, %v1064
        %v1066 = vlaneseq
        %v1067 = vshrl.u32 %v1066, 7
        %v1068 = vsub.s32 7, %v1067
        %v1069 = vrot.slane %v244, %v1068
        %v1070 = vlaneseq
        %v1071 = vshrl.u32 %v1070, 7
        %v1072 = vsub.s32 3, %v1071
        %v1073 = vrot.slane %v1065, %v1072
        %v1074 = vlaneseq
        %v1075 = vshrl.u32 %v1074, 7
        %v1076 = vsub.s32 3, %v1075
        %v1077 = vrot.slane %v1069, %v1076
        %vm1078 = vcmp.eq.s32.totalorder %v1073, %v246
        %vm1079 = vcmp.eq.s32.totalorder %v1077, %v246
        %vm1080 = vcmp.eq.s32.totalorder %v1073, %v247
        %vm1081 = vcmp.eq.s32.totalorder %v1077, %v247
        %vm1082 = vcmp.eq.s32.totalorder %v1073, %v248
        %vm1083 = vcmp.eq.s32.totalorder %v1077, %v248
        %vm1084 = vcmp.eq.s32.totalorder %v1073, %v249
        %vm1085 = vcmp.eq.s32.totalorder %v1077, %v249
        %vm1086 = vcmp.eq.s32.totalorder %v1073, %v250
        %vm1087 = vcmp.eq.s32.totalorder %v1077, %v250
        %vm1088 = vcmp.eq.s32.totalorder %v1073, %v251
        %vm1089 = vcmp.eq.s32.totalorder %v1077, %v251
        %vm1090 = vcmp.eq.s32.totalorder %v1073, %v252
        %vm1091 = vcmp.eq.s32.totalorder %v1077, %v252
        %vm1092 = vcmp.eq.s32.totalorder %v1073, %v253
        %vm1093 = vcmp.eq.s32.totalorder %v1077, %v253
        %vm1094 = vcmp.eq.s32.totalorder %v1073, %v254
        %vm1095 = vcmp.eq.s32.totalorder %v1077, %v254
        %vm1096 = vcmp.eq.s32.totalorder %v1073, %v255
        %vm1097 = vcmp.eq.s32.totalorder %v1077, %v255
        %vm1098 = vcmp.eq.s32.totalorder %v1073, %v256
        %vm1099 = vcmp.eq.s32.totalorder %v1077, %v256
        %vm1100 = vcmp.eq.s32.totalorder %v1073, %v257
        %vm1101 = vcmp.eq.s32.totalorder %v1077, %v257
        %vm1102 = vcmp.eq.s32.totalorder %v1073, %v258
        %vm1103 = vcmp.eq.s32.totalorder %v1077, %v258
        %vm1104 = vcmp.eq.s32.totalorder %v1073, %v259
        %vm1105 = vcmp.eq.s32.totalorder %v1077, %v259
        %vm1106 = vcmp.eq.s32.totalorder %v1073, %v260
        %vm1107 = vcmp.eq.s32.totalorder %v1077, %v260
        %vm1108 = vcmp.eq.s32.totalorder %v1073, %v261
        %vm1109 = vcmp.eq.s32.totalorder %v1077, %v261
        %vm1110 = vcmp.eq.s32.totalorder %v1073, %v262
        %vm1111 = vcmp.eq.s32.totalorder %v1077, %v262
        %vm1112 = vcmp.eq.s32.totalorder %v1073, %v263
        %vm1113 = vcmp.eq.s32.totalorder %v1077, %v263
        %vm1114 = vcmp.eq.s32.totalorder %v1073, %v264
        %vm1115 = vcmp.eq.s32.totalorder %v1077, %v264
        %vm1116 = vcmp.eq.s32.totalorder %v1073, %v265
        %vm1117 = vcmp.eq.s32.totalorder %v1077, %v265
        %vm1118 = vcmp.eq.s32.totalorder %v1073, %v266
        %vm1119 = vcmp.eq.s32.totalorder %v1077, %v266
        %vm1120 = vcmp.eq.s32.totalorder %v1073, %v267
        %vm1121 = vcmp.eq.s32.totalorder %v1077, %v267
        %vm1122 = vcmp.eq.s32.totalorder %v1073, %v268
        %vm1123 = vcmp.eq.s32.totalorder %v1077, %v268
        %vm1124 = vcmp.eq.s32.totalorder %v1073, %v269
        %vm1125 = vcmp.eq.s32.totalorder %v1077, %v269
        %vm1126 = vcmp.eq.s32.totalorder %v1073, %v270
        %vm1127 = vcmp.eq.s32.totalorder %v1077, %v270
        %vm1128 = vcmp.eq.s32.totalorder %v1073, %v271
        %vm1129 = vcmp.eq.s32.totalorder %v1077, %v271
        %vm1130 = vcmp.eq.s32.totalorder %v1073, %v272
        %vm1131 = vcmp.eq.s32.totalorder %v1077, %v272
        %vm1132 = vcmp.eq.s32.totalorder %v1073, %v273
        %vm1133 = vcmp.eq.s32.totalorder %v1077, %v273
        %vm1134 = vcmp.eq.s32.totalorder %v1073, %v274
        %vm1135 = vcmp.eq.s32.totalorder %v1077, %v274
        %vm1136 = vcmp.eq.s32.totalorder %v1073, %v275
        %vm1137 = vcmp.eq.s32.totalorder %v1077, %v275
        %vm1138 = vcmp.eq.s32.totalorder %v1073, %v276
        %vm1139 = vcmp.eq.s32.totalorder %v1077, %v276
        %vm1140 = vcmp.eq.s32.totalorder %v1073, %v277
        %vm1141 = vcmp.eq.s32.totalorder %v1077, %v277
        %v1142 = vsel %vm1078, 1, 0
        %v1143 = vsel %vm1079, 1, 0
        %v1144 = vsel %vm1080, 1, 0
        %v1145 = vsel %vm1081, 1, 0
        %v1146 = vsel %vm1082, 1, 0
        %v1147 = vsel %vm1083, 1, 0
        %v1148 = vsel %vm1084, 1, 0
        %v1149 = vsel %vm1085, 1, 0
        %v1150 = vsel %vm1086, 1, 0
        %v1151 = vsel %vm1087, 1, 0
        %v1152 = vsel %vm1088, 1, 0
        %v1153 = vsel %vm1089, 1, 0
        %v1154 = vsel %vm1090, 1, 0
        %v1155 = vsel %vm1091, 1, 0
        %v1156 = vsel %vm1092, 1, 0
        %v1157 = vsel %vm1093, 1, 0
        %v1158 = vsel %vm1094, 1, 0
        %v1159 = vsel %vm1095, 1, 0
        %v1160 = vsel %vm1096, 1, 0
        %v1161 = vsel %vm1097, 1, 0
        %v1162 = vsel %vm1098, 1, 0
        %v1163 = vsel %vm1099, 1, 0
        %v1164 = vsel %vm1100, 1, 0
        %v1165 = vsel %vm1101, 1, 0
        %v1166 = vsel %vm1102, 1, 0
        %v1167 = vsel %vm1103, 1, 0
        %v1168 = vsel %vm1104, 1, 0
        %v1169 = vsel %vm1105, 1, 0
        %v1170 = vsel %vm1106, 1, 0
        %v1171 = vsel %vm1107, 1, 0
        %v1172 = vsel %vm1108, 1, 0
        %v1173 = vsel %vm1109, 1, 0
        %v1174 = vsel %vm1110, 1, 0
        %v1175 = vsel %vm1111, 1, 0
        %v1176 = vsel %vm1112, 1, 0
        %v1177 = vsel %vm1113, 1, 0
        %v1178 = vsel %vm1114, 1, 0
        %v1179 = vsel %vm1115, 1, 0
        %v1180 = vsel %vm1116, 1, 0
        %v1181 = vsel %vm1117, 1, 0
        %v1182 = vsel %vm1118, 1, 0
        %v1183 = vsel %vm1119, 1, 0
        %v1184 = vsel %vm1120, 1, 0
        %v1185 = vsel %vm1121, 1, 0
        %v1186 = vsel %vm1122, 1, 0
        %v1187 = vsel %vm1123, 1, 0
        %v1188 = vsel %vm1124, 1, 0
        %v1189 = vsel %vm1125, 1, 0
        %v1190 = vsel %vm1126, 1, 0
        %v1191 = vsel %vm1127, 1, 0
        %v1192 = vsel %vm1128, 1, 0
        %v1193 = vsel %vm1129, 1, 0
        %v1194 = vsel %vm1130, 1, 0
        %v1195 = vsel %vm1131, 1, 0
        %v1196 = vsel %vm1132, 1, 0
        %v1197 = vsel %vm1133, 1, 0
        %v1198 = vsel %vm1134, 1, 0
        %v1199 = vsel %vm1135, 1, 0
        %v1200 = vsel %vm1136, 1, 0
        %v1201 = vsel %vm1137, 1, 0
        %v1202 = vsel %vm1138, 1, 0
        %v1203 = vsel %vm1139, 1, 0
        %v1204 = vsel %vm1140, 1, 0
        %v1205 = vsel %vm1141, 1, 0
        %v1206 = vcvt.s32.f32 %v1142
        %v1207 = vcvt.s32.f32 %v1143
        %v1208 = vcvt.s32.f32 %v1144
        %v1209 = vcvt.s32.f32 %v1145
        %v1210 = vcvt.s32.f32 %v1146
        %v1211 = vcvt.s32.f32 %v1147
        %v1212 = vcvt.s32.f32 %v1148
        %v1213 = vcvt.s32.f32 %v1149
        %v1214 = vcvt.s32.f32 %v1150
        %v1215 = vcvt.s32.f32 %v1151
        %v1216 = vcvt.s32.f32 %v1152
        %v1217 = vcvt.s32.f32 %v1153
        %v1218 = vcvt.s32.f32 %v1154
        %v1219 = vcvt.s32.f32 %v1155
        %v1220 = vcvt.s32.f32 %v1156
        %v1221 = vcvt.s32.f32 %v1157
        %v1222 = vcvt.s32.f32 %v1158
        %v1223 = vcvt.s32.f32 %v1159
        %v1224 = vcvt.s32.f32 %v1160
        %v1225 = vcvt.s32.f32 %v1161
        %v1226 = vcvt.s32.f32 %v1162
        %v1227 = vcvt.s32.f32 %v1163
        %v1228 = vcvt.s32.f32 %v1164
        %v1229 = vcvt.s32.f32 %v1165
        %v1230 = vcvt.s32.f32 %v1166
        %v1231 = vcvt.s32.f32 %v1167
        %v1232 = vcvt.s32.f32 %v1168
        %v1233 = vcvt.s32.f32 %v1169
        %v1234 = vcvt.s32.f32 %v1170
        %v1235 = vcvt.s32.f32 %v1171
        %v1236 = vcvt.s32.f32 %v1172
        %v1237 = vcvt.s32.f32 %v1173
        %v1238 = vcvt.s32.f32 %v1174
        %v1239 = vcvt.s32.f32 %v1175
        %v1240 = vcvt.s32.f32 %v1176
        %v1241 = vcvt.s32.f32 %v1177
        %v1242 = vcvt.s32.f32 %v1178
        %v1243 = vcvt.s32.f32 %v1179
        %v1244 = vcvt.s32.f32 %v1180
        %v1245 = vcvt.s32.f32 %v1181
        %v1246 = vcvt.s32.f32 %v1182
        %v1247 = vcvt.s32.f32 %v1183
        %v1248 = vcvt.s32.f32 %v1184
        %v1249 = vcvt.s32.f32 %v1185
        %v1250 = vcvt.s32.f32 %v1186
        %v1251 = vcvt.s32.f32 %v1187
        %v1252 = vcvt.s32.f32 %v1188
        %v1253 = vcvt.s32.f32 %v1189
        %v1254 = vcvt.s32.f32 %v1190
        %v1255 = vcvt.s32.f32 %v1191
        %v1256 = vcvt.s32.f32 %v1192
        %v1257 = vcvt.s32.f32 %v1193
        %v1258 = vcvt.s32.f32 %v1194
        %v1259 = vcvt.s32.f32 %v1195
        %v1260 = vcvt.s32.f32 %v1196
        %v1261 = vcvt.s32.f32 %v1197
        %v1262 = vcvt.s32.f32 %v1198
        %v1263 = vcvt.s32.f32 %v1199
        %v1264 = vcvt.s32.f32 %v1200
        %v1265 = vcvt.s32.f32 %v1201
        %v1266 = vcvt.s32.f32 %v1202
        %v1267 = vcvt.s32.f32 %v1203
        %v1268 = vcvt.s32.f32 %v1204
        %v1269 = vcvt.s32.f32 %v1205
        %v1270 = vpack.c.bf16 %v1208, %v1206
        %v1271 = vpack.c.bf16 %v1209, %v1207
        %v1272 = vpack.c.bf16 %v1212, %v1210
        %v1273 = vpack.c.bf16 %v1213, %v1211
        %v1274 = vpack.c.bf16 %v1216, %v1214
        %v1275 = vpack.c.bf16 %v1217, %v1215
        %v1276 = vpack.c.bf16 %v1220, %v1218
        %v1277 = vpack.c.bf16 %v1221, %v1219
        %v1278 = vpack.c.bf16 %v1224, %v1222
        %v1279 = vpack.c.bf16 %v1225, %v1223
        %v1280 = vpack.c.bf16 %v1228, %v1226
        %v1281 = vpack.c.bf16 %v1229, %v1227
        %v1282 = vpack.c.bf16 %v1232, %v1230
        %v1283 = vpack.c.bf16 %v1233, %v1231
        %v1284 = vpack.c.bf16 %v1236, %v1234
        %v1285 = vpack.c.bf16 %v1237, %v1235
        %v1286 = vpack.c.bf16 %v1240, %v1238
        %v1287 = vpack.c.bf16 %v1241, %v1239
        %v1288 = vpack.c.bf16 %v1244, %v1242
        %v1289 = vpack.c.bf16 %v1245, %v1243
        %v1290 = vpack.c.bf16 %v1248, %v1246
        %v1291 = vpack.c.bf16 %v1249, %v1247
        %v1292 = vpack.c.bf16 %v1252, %v1250
        %v1293 = vpack.c.bf16 %v1253, %v1251
        %v1294 = vpack.c.bf16 %v1256, %v1254
        %v1295 = vpack.c.bf16 %v1257, %v1255
        %v1296 = vpack.c.bf16 %v1260, %v1258
        %v1297 = vpack.c.bf16 %v1261, %v1259
        %v1298 = vpack.c.bf16 %v1264, %v1262
        %v1299 = vpack.c.bf16 %v1265, %v1263
        %v1300 = vpack.c.bf16 %v1268, %v1266
        %v1301 = vpack.c.bf16 %v1269, %v1267
        %v1302 = vadd.bf16 %v1030, %v1270
        %v1303 = vadd.bf16 %v1031, %v1271
        %v1304 = vadd.bf16 %v1032, %v1272
        %v1305 = vadd.bf16 %v1033, %v1273
        %v1306 = vadd.bf16 %v1034, %v1274
        %v1307 = vadd.bf16 %v1035, %v1275
        %v1308 = vadd.bf16 %v1036, %v1276
        %v1309 = vadd.bf16 %v1037, %v1277
        %v1310 = vadd.bf16 %v1038, %v1278
        %v1311 = vadd.bf16 %v1039, %v1279
        %v1312 = vadd.bf16 %v1040, %v1280
        %v1313 = vadd.bf16 %v1041, %v1281
        %v1314 = vadd.bf16 %v1042, %v1282
        %v1315 = vadd.bf16 %v1043, %v1283
        %v1316 = vadd.bf16 %v1044, %v1284
        %v1317 = vadd.bf16 %v1045, %v1285
        %v1318 = vadd.bf16 %v1046, %v1286
        %v1319 = vadd.bf16 %v1047, %v1287
        %v1320 = vadd.bf16 %v1048, %v1288
        %v1321 = vadd.bf16 %v1049, %v1289
        %v1322 = vadd.bf16 %v1050, %v1290
        %v1323 = vadd.bf16 %v1051, %v1291
        %v1324 = vadd.bf16 %v1052, %v1292
        %v1325 = vadd.bf16 %v1053, %v1293
        %v1326 = vadd.bf16 %v1054, %v1294
        %v1327 = vadd.bf16 %v1055, %v1295
        %v1328 = vadd.bf16 %v1056, %v1296
        %v1329 = vadd.bf16 %v1057, %v1297
        %v1330 = vadd.bf16 %v1058, %v1298
        %v1331 = vadd.bf16 %v1059, %v1299
        %v1332 = vadd.bf16 %v1060, %v1300
        %v1333 = vadd.bf16 %v1061, %v1301
        %v1334 = vsub.bf16 %v1030, %v1270
        %v1335 = vsub.bf16 %v1031, %v1271
        %v1336 = vsub.bf16 %v1032, %v1272
        %v1337 = vsub.bf16 %v1033, %v1273
        %v1338 = vsub.bf16 %v1034, %v1274
        %v1339 = vsub.bf16 %v1035, %v1275
        %v1340 = vsub.bf16 %v1036, %v1276
        %v1341 = vsub.bf16 %v1037, %v1277
        %v1342 = vsub.bf16 %v1038, %v1278
        %v1343 = vsub.bf16 %v1039, %v1279
        %v1344 = vsub.bf16 %v1040, %v1280
        %v1345 = vsub.bf16 %v1041, %v1281
        %v1346 = vsub.bf16 %v1042, %v1282
        %v1347 = vsub.bf16 %v1043, %v1283
        %v1348 = vsub.bf16 %v1044, %v1284
        %v1349 = vsub.bf16 %v1045, %v1285
        %v1350 = vsub.bf16 %v1046, %v1286
        %v1351 = vsub.bf16 %v1047, %v1287
        %v1352 = vsub.bf16 %v1048, %v1288
        %v1353 = vsub.bf16 %v1049, %v1289
        %v1354 = vsub.bf16 %v1050, %v1290
        %v1355 = vsub.bf16 %v1051, %v1291
        %v1356 = vsub.bf16 %v1052, %v1292
        %v1357 = vsub.bf16 %v1053, %v1293
        %v1358 = vsub.bf16 %v1054, %v1294
        %v1359 = vsub.bf16 %v1055, %v1295
        %v1360 = vsub.bf16 %v1056, %v1296
        %v1361 = vsub.bf16 %v1057, %v1297
        %v1362 = vsub.bf16 %v1058, %v1298
        %v1363 = vsub.bf16 %v1059, %v1299
        %v1364 = vsub.bf16 %v1060, %v1300
        %v1365 = vsub.bf16 %v1061, %v1301
        %v1366 = vld [vmem:[%s242] sm:$0x1f]
        %v1367 = vld [vmem:[%s242 + $0x8] sm:$0x1f]
        %v1368 = vpack.c.bf16 %v1366, %v1366
        %v1369 = vpack.c.bf16 %v1367, %v1367
        %1370 = vmatprep.subr.bf16.mxu0 %v773
        %1371 = vmatpush1.bf16.msra.mxu0 %v772
        %1372 = vmatprep.subr.bf16.mxu0 %v771
        %1373 = vmatpush1.bf16.msra.mxu0 %v770
        %1374 = vmatprep.subr.bf16.mxu0 %v769
        %1375 = vmatpush1.bf16.msra.mxu0 %v768
        %1376 = vmatprep.subr.bf16.mxu0 %v767
        %1377 = vmatpush1.bf16.msra.mxu0 %v766
        %1378 = vmatprep.subr.bf16.mxu0 %v765
        %1379 = vmatpush1.bf16.msra.mxu0 %v764
        %1380 = vmatprep.subr.bf16.mxu0 %v763
        %1381 = vmatpush1.bf16.msra.mxu0 %v762
        %1382 = vmatprep.subr.bf16.mxu0 %v761
        %1383 = vmatpush1.bf16.msra.mxu0 %v760
        %1384 = vmatprep.subr.bf16.mxu0 %v759
        %1385 = vmatpush1.bf16.msra.mxu0 %v758
        %1386 = vmatprep.subr.bf16.mxu0 %v789
        %1387 = vmatpush2.bf16.msra.mxu0 %v788
        %1388 = vmatprep.subr.bf16.mxu0 %v787
        %1389 = vmatpush2.bf16.msra.mxu0 %v786
        %1390 = vmatprep.subr.bf16.mxu0 %v785
        %1391 = vmatpush2.bf16.msra.mxu0 %v784
        %1392 = vmatprep.subr.bf16.mxu0 %v783
        %1393 = vmatpush2.bf16.msra.mxu0 %v782
        %1394 = vmatprep.subr.bf16.mxu0 %v781
        %1395 = vmatpush2.bf16.msra.mxu0 %v780
        %1396 = vmatprep.subr.bf16.mxu0 %v779
        %1397 = vmatpush2.bf16.msra.mxu0 %v778
        %1398 = vmatprep.subr.bf16.mxu0 %v777
        %1399 = vmatpush2.bf16.msra.mxu0 %v776
        %1400 = vmatprep.subr.bf16.mxu0 %v775
        %1401 = vmatpush2.bf16.msra.mxu0 %v774
        %1402 = vmatprep.mubr.bf16.mxu0 %v1369
        %1403 = vmatmul.mubr.bf16.gmra.mxu0 %v1368
        %v1404 = vpop.f32.mrf.mxu0
        %v1405 = vadd.f32 0.0, %v1404
        %v1406 = vpop.f32.mrf.mxu0
        %v1407 = vadd.f32 0.0, %v1406
        %v1408 = vpop.f32.mrf.mxu0
        %v1409 = vpop.f32.mrf.mxu0
        %1410 = vdwg.mxu0
        %1411 = vmatprep.subr.bf16.mxu0 %v1317
        %1412 = vmatpush1.bf16.msra.mxu0 %v1316
        %1413 = vmatprep.subr.bf16.mxu0 %v1315
        %1414 = vmatpush1.bf16.msra.mxu0 %v1314
        %1415 = vmatprep.subr.bf16.mxu0 %v1313
        %1416 = vmatpush1.bf16.msra.mxu0 %v1312
        %1417 = vmatprep.subr.bf16.mxu0 %v1311
        %1418 = vmatpush1.bf16.msra.mxu0 %v1310
        %1419 = vmatprep.subr.bf16.mxu0 %v1309
        %1420 = vmatpush1.bf16.msra.mxu0 %v1308
        %1421 = vmatprep.subr.bf16.mxu0 %v1307
        %1422 = vmatpush1.bf16.msra.mxu0 %v1306
        %1423 = vmatprep.subr.bf16.mxu0 %v1305
        %1424 = vmatpush1.bf16.msra.mxu0 %v1304
        %1425 = vmatprep.subr.bf16.mxu0 %v1303
        %1426 = vmatpush1.bf16.msra.mxu0 %v1302
        %1427 = vmatprep.subr.bf16.mxu0 %v1333
        %1428 = vmatpush2.bf16.msra.mxu0 %v1332
        %1429 = vmatprep.subr.bf16.mxu0 %v1331
        %1430 = vmatpush2.bf16.msra.mxu0 %v1330
        %1431 = vmatprep.subr.bf16.mxu0 %v1329
        %1432 = vmatpush2.bf16.msra.mxu0 %v1328
        %1433 = vmatprep.subr.bf16.mxu0 %v1327
        %1434 = vmatpush2.bf16.msra.mxu0 %v1326
        %1435 = vmatprep.subr.bf16.mxu0 %v1325
        %1436 = vmatpush2.bf16.msra.mxu0 %v1324
        %1437 = vmatprep.subr.bf16.mxu0 %v1323
        %1438 = vmatpush2.bf16.msra.mxu0 %v1322
        %1439 = vmatprep.subr.bf16.mxu0 %v1321
        %1440 = vmatpush2.bf16.msra.mxu0 %v1320
        %1441 = vmatprep.subr.bf16.mxu0 %v1319
        %1442 = vmatpush2.bf16.msra.mxu0 %v1318
        %1443 = vmatprep.mubr.bf16.mxu0 %v1369
        %1444 = vmatmul.mubr.bf16.gmra.mxu0 %v1368
        %v1445 = vpop.f32.mrf.mxu0
        %v1446 = vadd.f32 0.0, %v1445
        %v1447 = vpop.f32.mrf.mxu0
        %v1448 = vadd.f32 0.0, %v1447
        %v1449 = vpop.f32.mrf.mxu0
        %v1450 = vpop.f32.mrf.mxu0
        %1451 = vdwg.mxu0
        %1452 = vmatprep.subr.bf16.mxu0 %v805
        %1453 = vmatpush1.bf16.msra.mxu0 %v804
        %1454 = vmatprep.subr.bf16.mxu0 %v803
        %1455 = vmatpush1.bf16.msra.mxu0 %v802
        %1456 = vmatprep.subr.bf16.mxu0 %v801
        %1457 = vmatpush1.bf16.msra.mxu0 %v800
        %1458 = vmatprep.subr.bf16.mxu0 %v799
        %1459 = vmatpush1.bf16.msra.mxu0 %v798
        %1460 = vmatprep.subr.bf16.mxu0 %v797
        %1461 = vmatpush1.bf16.msra.mxu0 %v796
        %1462 = vmatprep.subr.bf16.mxu0 %v795
        %1463 = vmatpush1.bf16.msra.mxu0 %v794
        %1464 = vmatprep.subr.bf16.mxu0 %v793
        %1465 = vmatpush1.bf16.msra.mxu0 %v792
        %1466 = vmatprep.subr.bf16.mxu0 %v791
        %1467 = vmatpush1.bf16.msra.mxu0 %v790
        %1468 = vmatprep.subr.bf16.mxu0 %v821
        %1469 = vmatpush2.bf16.msra.mxu0 %v820
        %1470 = vmatprep.subr.bf16.mxu0 %v819
        %1471 = vmatpush2.bf16.msra.mxu0 %v818
        %1472 = vmatprep.subr.bf16.mxu0 %v817
        %1473 = vmatpush2.bf16.msra.mxu0 %v816
        %1474 = vmatprep.subr.bf16.mxu0 %v815
        %1475 = vmatpush2.bf16.msra.mxu0 %v814
        %1476 = vmatprep.subr.bf16.mxu0 %v813
        %1477 = vmatpush2.bf16.msra.mxu0 %v812
        %1478 = vmatprep.subr.bf16.mxu0 %v811
        %1479 = vmatpush2.bf16.msra.mxu0 %v810
        %1480 = vmatprep.subr.bf16.mxu0 %v809
        %1481 = vmatpush2.bf16.msra.mxu0 %v808
        %1482 = vmatprep.subr.bf16.mxu0 %v807
        %1483 = vmatpush2.bf16.msra.mxu0 %v806
        %1484 = vmatprep.mubr.bf16.mxu0 %v1369
        %1485 = vmatmul.mubr.bf16.gmra.mxu0 %v1368
        %v1486 = vpop.f32.mrf.mxu0
        %v1487 = vadd.f32 0.0, %v1486
        %v1488 = vpop.f32.mrf.mxu0
        %v1489 = vadd.f32 0.0, %v1488
        %v1490 = vpop.f32.mrf.mxu0
        %v1491 = vpop.f32.mrf.mxu0
        %1492 = vdwg.mxu0
        %1493 = vmatprep.subr.bf16.mxu0 %v1349
        %1494 = vmatpush1.bf16.msra.mxu0 %v1348
        %1495 = vmatprep.subr.bf16.mxu0 %v1347
        %1496 = vmatpush1.bf16.msra.mxu0 %v1346
        %1497 = vmatprep.subr.bf16.mxu0 %v1345
        %1498 = vmatpush1.bf16.msra.mxu0 %v1344
        %1499 = vmatprep.subr.bf16.mxu0 %v1343
        %1500 = vmatpush1.bf16.msra.mxu0 %v1342
        %1501 = vmatprep.subr.bf16.mxu0 %v1341
        %1502 = vmatpush1.bf16.msra.mxu0 %v1340
        %1503 = vmatprep.subr.bf16.mxu0 %v1339
        %1504 = vmatpush1.bf16.msra.mxu0 %v1338
        %1505 = vmatprep.subr.bf16.mxu0 %v1337
        %1506 = vmatpush1.bf16.msra.mxu0 %v1336
        %1507 = vmatprep.subr.bf16.mxu0 %v1335
        %1508 = vmatpush1.bf16.msra.mxu0 %v1334
        %1509 = vmatprep.subr.bf16.mxu0 %v1365
        %1510 = vmatpush2.bf16.msra.mxu0 %v1364
        %1511 = vmatprep.subr.bf16.mxu0 %v1363
        %1512 = vmatpush2.bf16.msra.mxu0 %v1362
        %1513 = vmatprep.subr.bf16.mxu0 %v1361
        %1514 = vmatpush2.bf16.msra.mxu0 %v1360
        %1515 = vmatprep.subr.bf16.mxu0 %v1359
        %1516 = vmatpush2.bf16.msra.mxu0 %v1358
        %1517 = vmatprep.subr.bf16.mxu0 %v1357
        %1518 = vmatpush2.bf16.msra.mxu0 %v1356
        %1519 = vmatprep.subr.bf16.mxu0 %v1355
        %1520 = vmatpush2.bf16.msra.mxu0 %v1354
        %1521 = vmatprep.subr.bf16.mxu0 %v1353
        %1522 = vmatpush2.bf16.msra.mxu0 %v1352
        %1523 = vmatprep.subr.bf16.mxu0 %v1351
        %1524 = vmatpush2.bf16.msra.mxu0 %v1350
        %1525 = vmatprep.mubr.bf16.mxu0 %v1369
        %1526 = vmatmul.mubr.bf16.gmra.mxu0 %v1368
        %v1527 = vpop.f32.mrf.mxu0
        %v1528 = vadd.f32 0.0, %v1527
        %v1529 = vpop.f32.mrf.mxu0
        %v1530 = vadd.f32 0.0, %v1529
        %v1531 = vpop.f32.mrf.mxu0
        %v1532 = vpop.f32.mrf.mxu0
        %1533 = vdwg.mxu0
        %v1534 = vpack.c.bf16 %v1405, %v1405
        %v1535 = vpack.c.bf16 %v1407, %v1407
        %v1536 = vpack.c.bf16 %v1446, %v1446
        %v1537 = vpack.c.bf16 %v1448, %v1448
        %v1538 = vpack.c.bf16 %v1487, %v1487
        %v1539 = vpack.c.bf16 %v1489, %v1489
        %v1540 = vpack.c.bf16 %v1528, %v1528
        %v1541 = vpack.c.bf16 %v1530, %v1530
        %v1542 = vand.u32 2147450879, %v1538
        %v1543 = vand.u32 2147450879, %v1539
        %v1544 = vand.u32 2147450879, %v1540
        %v1545 = vand.u32 2147450879, %v1541
        %v1547 = vshrl.u32 %v1534, 16
        %v1549 = vrot.slane %v1547, 5
        %v1550 = vshll.u32 %v1534, 16
        %v1552 = vrot.slane %v1550, 6
        %v1553 = vor.u32 %v1549, %v1552
        %v1555 = vshrl.u32 %v1535, 16
        %v1557 = vrot.slane %v1555, 5
        %v1558 = vshll.u32 %v1535, 16
        %v1560 = vrot.slane %v1558, 6
        %v1561 = vor.u32 %v1557, %v1560
        %v1566 = vrot.slane %v1536, 3
        %v1567 = vrot.slane %v1537, 3
        %v1569 = vshll.u32 %v1542, 16
        %v1571 = vrot.slane %v1569, 1
        %v1573 = vshll.u32 %v1543, 16
        %v1575 = vrot.slane %v1573, 1
        %v1576 = vshrl.u32 %v1542, 16
        %v1578 = vor.u32 %v1576, %v1571
        %v1579 = vshrl.u32 %v1543, 16
        %v1581 = vor.u32 %v1579, %v1575
        %v1586 = vrot.slane %v1544, 6
        %v1587 = vrot.slane %v1545, 6
        %vm1588 = vcmask 1042432
        %vm1589 = vsmask.f32 2304
        %vm1590 = vmand %vm1588, %vm1589
        %v1591 = vsel %vm1590, %v1368, %v1553
        %v1592 = vsel %vm1590, %v1369, %v1561
        %vm1593 = vcmask 1044480
        %v1596 = vsel %vm1593, %v1591, %v1566
        %v1600 = vsel %vm1593, %v1592, %v1567
        %vm1602 = vcmask 1047552
        %vm1603 = vsmask.f32 7424
        %vm1604 = vmand %vm1602, %vm1603
        %v1605 = vsel %vm1604, %v1596, %v1571
        %v1606 = vsel %vm1604, %v1600, %v1575
        %vm1607 = vcmask 1041408
        %v1610 = vsel %vm1607, %v1578, %v1586
        %v1613 = vsel %vm1607, %v1581, %v1587
        %v1614 = vld [vmem:[%s2] sm:$0xf]
        %v1615 = vld [vmem:[%s2 + $0x4] sm:$0xf]
        %v1616 = vld [vmem:[%s4] sm:$0xff]
        %v1617 = vld [vmem:[%s4 + $0x8] sm:$0xff]
        %1619 = vset.pattern.permute.xlu0 0
        %1620 = vperm.xlu0 %1619, %v1616
        %v1621 = vpop.permute.xlu0 %1620
        %1624 = vset.pattern.permute.xlu0 0
        %1625 = vperm.xlu0 %1624, %v1617
        %v1626 = vpop.permute.xlu0 %1625
        %v1630 = vunpack.c.l.b16 %v1614
        %v1631 = vunpack.c.l.b16 %v1615
        %v1632 = vpack.c.b16 %v1631, %v1630
        %vm1633 = vcmask 203776
        %v1635 = vsel %vm1633, %v1632, 0
        %vm1637 = vcmask 1043456
        %v1638 = vsel %vm1637, 4294967295, 65535
        %v1639 = vsel %vm1593, %v1638, 0
        %v1640 = vand.u32 %v1610, %v1639
        %v1642 = vand.u32 %v1613, %v1639
        %1644 = vmatprep.subr.bf16.mxu0 0
        %1645 = vmatpush1.bf16.msra.mxu0 0
        %1646 = vmatprep.subr.bf16.mxu0 0
        %1647 = vmatpush1.bf16.msra.mxu0 0
        %1648 = vmatprep.subr.bf16.mxu0 0
        %1649 = vmatpush1.bf16.msra.mxu0 0
        %1650 = vmatprep.subr.bf16.mxu0 0
        %1651 = vmatpush1.bf16.msra.mxu0 0
        %1652 = vmatprep.subr.bf16.mxu0 0
        %1653 = vmatpush1.bf16.msra.mxu0 0
        %1654 = vmatprep.subr.bf16.mxu0 0
        %1655 = vmatpush1.bf16.msra.mxu0 0
        %1656 = vmatprep.subr.bf16.mxu0 %v1642
        %1657 = vmatpush1.bf16.msra.mxu0 %v1640
        %1658 = vmatprep.subr.bf16.mxu0 %v1606
        %1659 = vmatpush1.bf16.msra.mxu0 %v1605
        %1660 = vmatprep.subr.bf16.mxu0 0
        %1661 = vmatpush2.bf16.msra.mxu0 0
        %1662 = vmatprep.subr.bf16.mxu0 0
        %1663 = vmatpush2.bf16.msra.mxu0 0
        %1664 = vmatprep.subr.bf16.mxu0 0
        %1665 = vmatpush2.bf16.msra.mxu0 0
        %1666 = vmatprep.subr.bf16.mxu0 0
        %1667 = vmatpush2.bf16.msra.mxu0 0
        %1668 = vmatprep.subr.bf16.mxu0 0
        %1669 = vmatpush2.bf16.msra.mxu0 0
        %1670 = vmatprep.subr.bf16.mxu0 0
        %1671 = vmatpush2.bf16.msra.mxu0 0
        %1672 = vmatprep.subr.bf16.mxu0 0
        %1673 = vmatpush2.bf16.msra.mxu0 0
        %1674 = vmatprep.subr.bf16.mxu0 0
        %1675 = vmatpush2.bf16.msra.mxu0 0
        %1676 = vmatprep.mubr.bf16.mxu0 0
        %1677 = vmatmul.mubr.bf16.gmra.mxu0 %v1635
        %v1678 = vpop.f32.mrf.mxu0
        %v1679 = vadd.f32 %v1621, %v1678
        %v1680 = vpop.f32.mrf.mxu0
        %v1681 = vadd.f32 %v1621, %v1680
        %v1682 = vpop.f32.mrf.mxu0
        %v1683 = vadd.f32 %v1626, %v1682
        %v1684 = vpop.f32.mrf.mxu0
        %v1685 = vadd.f32 %v1626, %v1684
        %1686 = vdwg.mxu0
        %v1687 = vpack.c.bf16 %v1683, %v1679
        %v1688 = vpack.c.bf16 %v1685, %v1681
        %1689 = vmatprep.subr.bf16.mxu0 %v773
        %1690 = vmatpush1.bf16.msra.mxu0 %v772
        %1691 = vmatprep.subr.bf16.mxu0 %v771
        %1692 = vmatpush1.bf16.msra.mxu0 %v770
        %1693 = vmatprep.subr.bf16.mxu0 %v769
        %1694 = vmatpush1.bf16.msra.mxu0 %v768
        %1695 = vmatprep.subr.bf16.mxu0 %v767
        %1696 = vmatpush1.bf16.msra.mxu0 %v766
        %1697 = vmatprep.subr.bf16.mxu0 %v765
        %1698 = vmatpush1.bf16.msra.mxu0 %v764
        %1699 = vmatprep.subr.bf16.mxu0 %v763
        %1700 = vmatpush1.bf16.msra.mxu0 %v762
        %1701 = vmatprep.subr.bf16.mxu0 %v761
        %1702 = vmatpush1.bf16.msra.mxu0 %v760
        %1703 = vmatprep.subr.bf16.mxu0 %v759
        %1704 = vmatpush1.bf16.msra.mxu0 %v758
        %1705 = vmatprep.subr.bf16.mxu0 %v789
        %1706 = vmatpush2.bf16.msra.mxu0 %v788
        %1707 = vmatprep.subr.bf16.mxu0 %v787
        %1708 = vmatpush2.bf16.msra.mxu0 %v786
        %1709 = vmatprep.subr.bf16.mxu0 %v785
        %1710 = vmatpush2.bf16.msra.mxu0 %v784
        %1711 = vmatprep.subr.bf16.mxu0 %v783
        %1712 = vmatpush2.bf16.msra.mxu0 %v782
        %1713 = vmatprep.subr.bf16.mxu0 %v781
        %1714 = vmatpush2.bf16.msra.mxu0 %v780
        %1715 = vmatprep.subr.bf16.mxu0 %v779
        %1716 = vmatpush2.bf16.msra.mxu0 %v778
        %1717 = vmatprep.subr.bf16.mxu0 %v777
        %1718 = vmatpush2.bf16.msra.mxu0 %v776
        %1719 = vmatprep.subr.bf16.mxu0 %v775
        %1720 = vmatpush2.bf16.msra.mxu0 %v774
        %1721 = vmatprep.mubr.bf16.mxu0 %v1688
        %1722 = vmatmul.mubr.bf16.gmra.mxu0 %v1687
        %v1723 = vpop.f32.mrf.mxu0
        %v1724 = vadd.f32 0.0, %v1723
        %v1725 = vpop.f32.mrf.mxu0
        %v1726 = vadd.f32 0.0, %v1725
        %v1727 = vpop.f32.mrf.mxu0
        %v1728 = vadd.f32 0.0, %v1727
        %v1729 = vpop.f32.mrf.mxu0
        %v1730 = vadd.f32 0.0, %v1729
        %1731 = vdwg.mxu0
        %1732 = vmatprep.subr.bf16.mxu0 %v1317
        %1733 = vmatpush1.bf16.msra.mxu0 %v1316
        %1734 = vmatprep.subr.bf16.mxu0 %v1315
        %1735 = vmatpush1.bf16.msra.mxu0 %v1314
        %1736 = vmatprep.subr.bf16.mxu0 %v1313
        %1737 = vmatpush1.bf16.msra.mxu0 %v1312
        %1738 = vmatprep.subr.bf16.mxu0 %v1311
        %1739 = vmatpush1.bf16.msra.mxu0 %v1310
        %1740 = vmatprep.subr.bf16.mxu0 %v1309
        %1741 = vmatpush1.bf16.msra.mxu0 %v1308
        %1742 = vmatprep.subr.bf16.mxu0 %v1307
        %1743 = vmatpush1.bf16.msra.mxu0 %v1306
        %1744 = vmatprep.subr.bf16.mxu0 %v1305
        %1745 = vmatpush1.bf16.msra.mxu0 %v1304
        %1746 = vmatprep.subr.bf16.mxu0 %v1303
        %1747 = vmatpush1.bf16.msra.mxu0 %v1302
        %1748 = vmatprep.subr.bf16.mxu0 %v1333
        %1749 = vmatpush2.bf16.msra.mxu0 %v1332
        %1750 = vmatprep.subr.bf16.mxu0 %v1331
        %1751 = vmatpush2.bf16.msra.mxu0 %v1330
        %1752 = vmatprep.subr.bf16.mxu0 %v1329
        %1753 = vmatpush2.bf16.msra.mxu0 %v1328
        %1754 = vmatprep.subr.bf16.mxu0 %v1327
        %1755 = vmatpush2.bf16.msra.mxu0 %v1326
        %1756 = vmatprep.subr.bf16.mxu0 %v1325
        %1757 = vmatpush2.bf16.msra.mxu0 %v1324
        %1758 = vmatprep.subr.bf16.mxu0 %v1323
        %1759 = vmatpush2.bf16.msra.mxu0 %v1322
        %1760 = vmatprep.subr.bf16.mxu0 %v1321
        %1761 = vmatpush2.bf16.msra.mxu0 %v1320
        %1762 = vmatprep.subr.bf16.mxu0 %v1319
        %1763 = vmatpush2.bf16.msra.mxu0 %v1318
        %1764 = vmatprep.mubr.bf16.mxu0 %v1688
        %1765 = vmatmul.mubr.bf16.gmra.mxu0 %v1687
        %v1766 = vpop.f32.mrf.mxu0
        %v1767 = vadd.f32 0.0, %v1766
        %v1768 = vpop.f32.mrf.mxu0
        %v1769 = vadd.f32 0.0, %v1768
        %v1770 = vpop.f32.mrf.mxu0
        %v1771 = vadd.f32 0.0, %v1770
        %v1772 = vpop.f32.mrf.mxu0
        %v1773 = vadd.f32 0.0, %v1772
        %1774 = vdwg.mxu0
        %1775 = vmatprep.subr.bf16.mxu0 %v805
        %1776 = vmatpush1.bf16.msra.mxu0 %v804
        %1777 = vmatprep.subr.bf16.mxu0 %v803
        %1778 = vmatpush1.bf16.msra.mxu0 %v802
        %1779 = vmatprep.subr.bf16.mxu0 %v801
        %1780 = vmatpush1.bf16.msra.mxu0 %v800
        %1781 = vmatprep.subr.bf16.mxu0 %v799
        %1782 = vmatpush1.bf16.msra.mxu0 %v798
        %1783 = vmatprep.subr.bf16.mxu0 %v797
        %1784 = vmatpush1.bf16.msra.mxu0 %v796
        %1785 = vmatprep.subr.bf16.mxu0 %v795
        %1786 = vmatpush1.bf16.msra.mxu0 %v794
        %1787 = vmatprep.subr.bf16.mxu0 %v793
        %1788 = vmatpush1.bf16.msra.mxu0 %v792
        %1789 = vmatprep.subr.bf16.mxu0 %v791
        %1790 = vmatpush1.bf16.msra.mxu0 %v790
        %1791 = vmatprep.subr.bf16.mxu0 %v821
        %1792 = vmatpush2.bf16.msra.mxu0 %v820
        %1793 = vmatprep.subr.bf16.mxu0 %v819
        %1794 = vmatpush2.bf16.msra.mxu0 %v818
        %1795 = vmatprep.subr.bf16.mxu0 %v817
        %1796 = vmatpush2.bf16.msra.mxu0 %v816
        %1797 = vmatprep.subr.bf16.mxu0 %v815
        %1798 = vmatpush2.bf16.msra.mxu0 %v814
        %1799 = vmatprep.subr.bf16.mxu0 %v813
        %1800 = vmatpush2.bf16.msra.mxu0 %v812
        %1801 = vmatprep.subr.bf16.mxu0 %v811
        %1802 = vmatpush2.bf16.msra.mxu0 %v810
        %1803 = vmatprep.subr.bf16.mxu0 %v809
        %1804 = vmatpush2.bf16.msra.mxu0 %v808
        %1805 = vmatprep.subr.bf16.mxu0 %v807
        %1806 = vmatpush2.bf16.msra.mxu0 %v806
        %1807 = vmatprep.mubr.bf16.mxu0 %v1688
        %1808 = vmatmul.mubr.bf16.gmra.mxu0 %v1687
        %v1809 = vpop.f32.mrf.mxu0
        %v1810 = vadd.f32 0.0, %v1809
        %v1811 = vpop.f32.mrf.mxu0
        %v1812 = vadd.f32 0.0, %v1811
        %v1813 = vpop.f32.mrf.mxu0
        %v1814 = vadd.f32 0.0, %v1813
        %v1815 = vpop.f32.mrf.mxu0
        %v1816 = vadd.f32 0.0, %v1815
        %1817 = vdwg.mxu0
        %1818 = vmatprep.subr.bf16.mxu0 %v1349
        %1819 = vmatpush1.bf16.msra.mxu0 %v1348
        %1820 = vmatprep.subr.bf16.mxu0 %v1347
        %1821 = vmatpush1.bf16.msra.mxu0 %v1346
        %1822 = vmatprep.subr.bf16.mxu0 %v1345
        %1823 = vmatpush1.bf16.msra.mxu0 %v1344
        %1824 = vmatprep.subr.bf16.mxu0 %v1343
        %1825 = vmatpush1.bf16.msra.mxu0 %v1342
        %1826 = vmatprep.subr.bf16.mxu0 %v1341
        %1827 = vmatpush1.bf16.msra.mxu0 %v1340
        %1828 = vmatprep.subr.bf16.mxu0 %v1339
        %1829 = vmatpush1.bf16.msra.mxu0 %v1338
        %1830 = vmatprep.subr.bf16.mxu0 %v1337
        %1831 = vmatpush1.bf16.msra.mxu0 %v1336
        %1832 = vmatprep.subr.bf16.mxu0 %v1335
        %1833 = vmatpush1.bf16.msra.mxu0 %v1334
        %1834 = vmatprep.subr.bf16.mxu0 %v1365
        %1835 = vmatpush2.bf16.msra.mxu0 %v1364
        %1836 = vmatprep.subr.bf16.mxu0 %v1363
        %1837 = vmatpush2.bf16.msra.mxu0 %v1362
        %1838 = vmatprep.subr.bf16.mxu0 %v1361
        %1839 = vmatpush2.bf16.msra.mxu0 %v1360
        %1840 = vmatprep.subr.bf16.mxu0 %v1359
        %1841 = vmatpush2.bf16.msra.mxu0 %v1358
        %1842 = vmatprep.subr.bf16.mxu0 %v1357
        %1843 = vmatpush2.bf16.msra.mxu0 %v1356
        %1844 = vmatprep.subr.bf16.mxu0 %v1355
        %1845 = vmatpush2.bf16.msra.mxu0 %v1354
        %1846 = vmatprep.subr.bf16.mxu0 %v1353
        %1847 = vmatpush2.bf16.msra.mxu0 %v1352
        %1848 = vmatprep.subr.bf16.mxu0 %v1351
        %1849 = vmatpush2.bf16.msra.mxu0 %v1350
        %1850 = vmatprep.mubr.bf16.mxu0 %v1688
        %1851 = vmatmul.mubr.bf16.gmra.mxu0 %v1687
        %v1852 = vpop.f32.mrf.mxu0
        %v1853 = vadd.f32 0.0, %v1852
        %v1854 = vpop.f32.mrf.mxu0
        %v1855 = vadd.f32 0.0, %v1854
        %v1856 = vpop.f32.mrf.mxu0
        %v1857 = vadd.f32 0.0, %v1856
        %v1858 = vpop.f32.mrf.mxu0
        %v1859 = vadd.f32 0.0, %v1858
        %1860 = vdwg.mxu0
        %v1861 = vpack.c.bf16 %v1728, %v1724
        %v1862 = vpack.c.bf16 %v1730, %v1726
        %v1863 = vpack.c.bf16 %v1771, %v1767
        %v1864 = vpack.c.bf16 %v1773, %v1769
        %v1865 = vpack.c.bf16 %v1814, %v1810
        %v1866 = vpack.c.bf16 %v1816, %v1812
        %v1867 = vpack.c.bf16 %v1857, %v1853
        %v1868 = vpack.c.bf16 %v1859, %v1855
        %v1869 = vand.u32 2147450879, %v1865
        %v1870 = vand.u32 2147450879, %v1866
        %v1871 = vand.u32 2147450879, %v1867
        %v1872 = vand.u32 2147450879, %v1868
        %v1873 = vld [vmem:[%s3] sm:$0xf]
        %v1874 = vld [vmem:[%s3 + $0x4] sm:$0xf]
        %1875 = vset.pattern.permute.xlu0 1
        %1876 = vperm.xlu0 %1875, %v1616
        %v1877 = vpop.permute.xlu0 %1876
        %1879 = vset.pattern.permute.xlu0 1
        %1880 = vperm.xlu0 %1879, %v1617
        %v1881 = vpop.permute.xlu0 %1880
        %v1885 = vunpack.c.l.b16 %v1873
        %v1886 = vunpack.c.l.b16 %v1874
        %v1887 = vpack.c.b16 %v1886, %v1885
        %vm1888 = vcmask 654336
        %v1890 = vsel %vm1888, %v1887, 0
        %1892 = vmatprep.subr.bf16.mxu0 0
        %1893 = vmatpush1.bf16.msra.mxu0 0
        %1894 = vmatprep.subr.bf16.mxu0 0
        %1895 = vmatpush1.bf16.msra.mxu0 0
        %1896 = vmatprep.subr.bf16.mxu0 0
        %1897 = vmatpush1.bf16.msra.mxu0 0
        %1898 = vmatprep.subr.bf16.mxu0 %v1872
        %1899 = vmatpush1.bf16.msra.mxu0 %v1871
        %1900 = vmatprep.subr.bf16.mxu0 %v1870
        %1901 = vmatpush1.bf16.msra.mxu0 %v1869
        %1902 = vmatprep.subr.bf16.mxu0 %v1864
        %1903 = vmatpush1.bf16.msra.mxu0 %v1863
        %1904 = vmatprep.subr.bf16.mxu0 %v1862
        %1905 = vmatpush1.bf16.msra.mxu0 %v1861
        %1906 = vmatprep.subr.bf16.mxu0 %v1688
        %1907 = vmatpush1.bf16.msra.mxu0 %v1687
        %1908 = vmatprep.subr.bf16.mxu0 0
        %1909 = vmatpush2.bf16.msra.mxu0 0
        %1910 = vmatprep.subr.bf16.mxu0 0
        %1911 = vmatpush2.bf16.msra.mxu0 0
        %1912 = vmatprep.subr.bf16.mxu0 0
        %1913 = vmatpush2.bf16.msra.mxu0 0
        %1914 = vmatprep.subr.bf16.mxu0 0
        %1915 = vmatpush2.bf16.msra.mxu0 0
        %1916 = vmatprep.subr.bf16.mxu0 0
        %1917 = vmatpush2.bf16.msra.mxu0 0
        %1918 = vmatprep.subr.bf16.mxu0 0
        %1919 = vmatpush2.bf16.msra.mxu0 0
        %1920 = vmatprep.subr.bf16.mxu0 0
        %1921 = vmatpush2.bf16.msra.mxu0 0
        %1922 = vmatprep.subr.bf16.mxu0 0
        %1923 = vmatpush2.bf16.msra.mxu0 0
        %1924 = vmatprep.mubr.bf16.mxu0 0
        %1925 = vmatmul.mubr.bf16.gmra.mxu0 %v1890
        %v1926 = vpop.f32.mrf.mxu0
        %v1927 = vadd.f32 %v1877, %v1926
        %v1928 = vpop.f32.mrf.mxu0
        %v1929 = vadd.f32 %v1877, %v1928
        %v1930 = vpop.f32.mrf.mxu0
        %v1931 = vadd.f32 %v1881, %v1930
        %v1932 = vpop.f32.mrf.mxu0
        %v1933 = vadd.f32 %v1881, %v1932
        %1934 = vdwg.mxu0
        %1935 = vst [vmem:[%s232] sm:$0xff] %v1927
        %1936 = vst [vmem:[%s232 + $0x8] sm:$0xff] %v1929
        %1937 = vst [vmem:[%s232 + $0x10] sm:$0xff] %v1931
        %1938 = vst [vmem:[%s232 + $0x18] sm:$0xff] %v1933
        %s1939 = sand.u32 %s142, 1
        %s1940 = scalar_lea.sflag [#allocation3], %s1939
        %s1941 = sand.u32 %s142, 1
        %s1942 = smul.addr %s1941, 32
        %s1943 = scalar_lea.vmem [#allocation2], %s1942
        // Predicated region
        $region41: #{tpu_custom_call.1} parent=39 // pred_check
          %p1944 = pneg %p152
        $region42: #{tpu_custom_call.1} parent=39 // pred_check_branch
          %1946 = sbr.rel (%p1944) target = $region44
        $region43: #{tpu_custom_call.1} parent=39 // pred_region
          %s1948 = ssub.s32 512, 512
          %1949 = vsyncadd %s1940, %s1948
          %s1950 = smul.addr %s19, 4
          %s1951 = smul.addr %s1950, 128
          %s1952 = scalar_lea.hbm %s5, %s1951
          %s1953 = sshll.u32 %s1943, 4
          %s1954 = int_to_ptr.vmem [resolvable:$true] %s1953
          %1959 = dma.vmem_to_hbm [thread:$0]  %s1954, 512, %s1952, %s1940, 256, 256, 16
        $region44: #{tpu_custom_call.1} parent=39 // pred_fallthru
          _
      $region40: #{tpu_custom_call.1} parent=5 // pred_fallthru
        _
      %p1960 = scmp.le.s32.totalorder 2, %s14
      // Predicated region
      $region45: #{tpu_custom_call.1} parent=5 // pred_check
        %p1961 = pneg %p1960
      $region46: #{tpu_custom_call.1} parent=5 // pred_check_branch
        %1963 = sbr.rel (%p1961) target = $region48
      $region47: #{tpu_custom_call.1} parent=5 // pred_region
        %s1964 = ssub.s32 %s14, 2
        // Predicated region
        $region49: #{tpu_custom_call.1} parent=47 // pred_check
          %p1965 = pneg %p158
        $region50: #{tpu_custom_call.1} parent=47 // pred_check_branch
          %1967 = sbr.rel (%p1965) target = $region52
        $region51: #{tpu_custom_call.1} parent=47 // pred_region
          %s1968 = sand.u32 %s143, 1
          %s1969 = scalar_lea.sflag [#allocation3], %s1968
          %s1970 = sand.u32 %s143, 1
          %s1971 = smul.addr %s1970, 32
          %s1972 = scalar_lea.vmem [#allocation2], %s1971
          %1973 = dma.done %s1969, 512
        $region52: #{tpu_custom_call.1} parent=47 // pred_fallthru
          _
      $region48: #{tpu_custom_call.1} parent=5 // pred_fallthru
        _
    $region6: #{tpu_custom_call.1} parent=1 // loop_footer
      %s18 = sadd.s32 1, %s14
    $region7: #{tpu_custom_call.1} parent=1 // loop_footer_branch
      %13 = sbr.rel target = $region3
    $region8: #{tpu_custom_call.1} parent=1 // loop_exit
      _
    %1974 = vsyncpa [#allocation3], 1
    %s1975 = scalar_lea.sflag [#allocation3], 1
    %1976 = vsyncpa %s1975, 1

</llo_original>
